<compile_context>
chip_gen: v7x
topology: tpu7x:2x2x1
jax: 0.10.0
libtpu: 0.0.40
codegen_flags: <defaults>
</compile_context>

<pallas_src>
import jax
import jax.numpy as jnp
from jax.experimental import pallas as pl
from jax.experimental.pallas import tpu as pltpu


_LANE = 128
_SUBLANE = 8


def _round_up(n, m):
    return ((n + m - 1) // m) * m


def _cdiv(a, b):
    return -(-a // b)


def _pad2d(a, rows, cols):
    r, c = a.shape
    if r == rows and c == cols:
        return a
    return jnp.pad(a, ((0, rows - r), (0, cols - c)))


def _tpu_params():
    """Best-effort chip introspection; safe conservative fallbacks."""
    vmem_cap = 64 << 20     # conservative default (v7x per-TC VMEM)
    multi_tc = False        # 2 TensorCores sharing the grid (v7x / v4 megacore)
    tile_mult = 256         # preferred M-tile multiple (MXU rows)
    try:
        info = pltpu.get_tpu_info()
        cap = getattr(info, "vmem_capacity_bytes", None)
        if cap:
            vmem_cap = int(cap)
    except Exception:
        pass
    try:
        kind = jax.devices()[0].device_kind.lower()
        multi_tc = ("7" in kind) or ("v4" in kind)
        if not any(t in kind for t in ("v6", "6 lite", "7")):
            tile_mult = 128   # v5e and older: 128-wide MXU
    except Exception:
        pass
    return vmem_cap, multi_tc, tile_mult


def _make_kernel(num_layers: int, split_theta: bool):
    """Kernel body for a fixed (static) number of hidden layers."""

    def kernel(*refs):
        x_ref = refs[0]
        layer_refs = refs[1:1 + 2 * num_layers]
        rest = refs[1 + 2 * num_layers:]

        h = x_ref[...]  # (tile, input_size) float32
        # Hot path: statically-unrolled chain of MXU matmuls + VPU bias/ReLU.
        for i in range(num_layers):
            w = layer_refs[2 * i][...]
            b = layer_refs[2 * i + 1][...]          # (1, Lp) float32
            h = jnp.maximum(
                jnp.dot(h.astype(w.dtype), w,
                        preferred_element_type=jnp.float32) + b, 0.0)

        if split_theta:
            # Two direct lane-dense matmuls into the output refs.
            wtb_ref, btb_ref, wtf_ref, btf_ref, back_ref, fore_ref = rest
            wtb = wtb_ref[...]
            back_ref[...] = (
                jnp.dot(h.astype(wtb.dtype), wtb,
                        preferred_element_type=jnp.float32)
                + btb_ref[...]).astype(back_ref.dtype)
            wtf = wtf_ref[...]
            fore_ref[...] = (
                jnp.dot(h.astype(wtf.dtype), wtf,
                        preferred_element_type=jnp.float32)
                + btf_ref[...]).astype(fore_ref.dtype)
        else:
            # Fused theta projection (narrower than the padded split); the
            # backcast/forecast split is a cheap XLA slice in the wrapper.
            wt_ref, bt_ref, theta_ref = rest
            wt = wt_ref[...]
            theta_ref[...] = (
                jnp.dot(h.astype(wt.dtype), wt,
                        preferred_element_type=jnp.float32)
                + bt_ref[...]).astype(theta_ref.dtype)

    return kernel


def nbeats_block_forward(x, layer_weights, layer_biases, theta_w, theta_b,
                         backcast_size, forecast_size, *,
                         batch_tile=None, param_dtype=jnp.bfloat16,
                         out_dtype=jnp.float32):
    """N-BEATS block forward pass with a single Pallas kernel.

    Args:
      x:             (B, input_size) float32
      layer_weights: list of (in, layer_size) float32 arrays
      layer_biases:  list of (1, layer_size) float32 arrays
      theta_w:       (layer_size, theta_size) float32
      theta_b:       (1, theta_size) float32
      param_dtype:   dtype for the weight matrices inside the kernel (bf16
                     default: native MXU operands; accumulation stays f32 and
                     the f32 input activations are downcast per-matmul)
      out_dtype:     dtype of backcast/forecast outputs (f32 default; bf16
                     halves writeback if the residual stack runs in bf16)
    Returns:
      (backcast, forecast): (B, backcast_size), (B, forecast_size) in out_dtype
    """
    B, input_size = x.shape
    num_layers = len(layer_weights)
    layer_size = layer_weights[0].shape[1]
    theta_size = theta_w.shape[1]
    assert theta_size == backcast_size + forecast_size

    vmem_cap, multi_tc, tile_mult = _tpu_params()
    cap_limit = min((vmem_cap * 3) // 4, 100 << 20)
    # Single-buffer the (constant index_map) params on low-VMEM chips (v7x).
    single_buffer_params = vmem_cap <= (96 << 20)

    if x.dtype != jnp.float32:
        x = x.astype(jnp.float32)

    # ---- lane-align hidden / output feature dims (zero-pad: exact no-op). ----
    lp = _round_up(layer_size, _LANE)
    tp = _round_up(theta_size, _LANE)
    bcp = _round_up(backcast_size, _LANE)
    fcp = _round_up(forecast_size, _LANE)
    # Fused single theta matmul when it is strictly narrower than the split.
    split_theta = tp >= (bcp + fcp)

    # ---- pad (and down-cast) parameters; biases stay float32. x keeps its ----
    # ---- unpadded K, so only layer-0's weight keeps K = input_size.       ----
    in_dims_p = [input_size] + [lp] * (num_layers - 1)
    padded_ws, padded_bs = [], []
    for w, b, dp in zip(layer_weights, layer_biases, in_dims_p):
        padded_ws.append(_pad2d(w.astype(jnp.float32), dp, lp).astype(param_dtype))
        padded_bs.append(_pad2d(b.astype(jnp.float32), 1, lp))

    if split_theta:
        wtb = _pad2d(theta_w[:, :backcast_size].astype(jnp.float32),
                     lp, bcp).astype(param_dtype)
        btb = _pad2d(theta_b[:, :backcast_size].astype(jnp.float32), 1, bcp)
        wtf = _pad2d(theta_w[:, backcast_size:].astype(jnp.float32),
                     lp, fcp).astype(param_dtype)
        btf = _pad2d(theta_b[:, backcast_size:].astype(jnp.float32), 1, fcp)
        theta_params = [wtb, btb, wtf, btf]
        out_cols = bcp + fcp
    else:
        wt = _pad2d(theta_w.astype(jnp.float32), lp, tp).astype(param_dtype)
        bt = _pad2d(theta_b.astype(jnp.float32), 1, tp)
        theta_params = [wt, bt]
        out_cols = tp

    layer_params = []
    for w, b in zip(padded_ws, padded_bs):
        layer_params += [w, b]
    all_params = layer_params + theta_params
    param_bytes = sum(int(a.size) * a.dtype.itemsize for a in all_params)
    out_itemsize = jnp.dtype(out_dtype).itemsize

    # ---- batch tile: big by default (amortize ~0.35us/step), multiple of ----
    # ---- the chip's MXU M-dim when possible; split only on 2-TC chips.   ----
    if batch_tile is None:
        batch_tile = 1024
    batch_tile = max(_SUBLANE, min(int(batch_tile), _round_up(B, _SUBLANE)))
    if batch_tile >= tile_mult:
        batch_tile = (batch_tile // tile_mult) * tile_mult
    else:
        batch_tile = _round_up(batch_tile, _SUBLANE)

    def _grid(bt):
        bpad = _round_up(B, bt)
        return bpad, bpad // bt

    bp, grid_b = _grid(batch_tile)

    if multi_tc:
        if grid_b == 1 and batch_tile >= 2 * _SUBLANE:
            batch_tile = _round_up(batch_tile // 2, _SUBLANE)
        elif grid_b > 1 and grid_b % 2 == 1:
            # Even grid -> balanced load across the two TensorCores.
            batch_tile = max(_SUBLANE,
                             _round_up(_cdiv(B, grid_b + 1), _SUBLANE))
        bp, grid_b = _grid(batch_tile)

    # ---- VMEM footprint estimate; shrink the tile rather than clamping. ----
    def _vmem_est(bt):
        x_bytes = 4 * bt * input_size
        out_bytes = out_itemsize * bt * out_cols
        act_bytes = 4 * bt * max(lp, out_cols)
        # 2x params covers the no-Buffered(1) fallback; 2x streamed I/O for
        # double buffering; ~4x activations for operand copies; 2 MiB slack.
        return (2 * param_bytes + 2 * (x_bytes + out_bytes)
                + 4 * act_bytes + (2 << 20))

    while _vmem_est(batch_tile) > cap_limit and batch_tile > _SUBLANE:
        batch_tile = max(_SUBLANE, _round_up(batch_tile // 2, _SUBLANE))
        bp, grid_b = _grid(batch_tile)

    vmem_limit = int(min(max(_vmem_est(batch_tile), 32 << 20), cap_limit))

    # Only the batch dim of x is (maybe) padded; feature dim stays unpadded.
    xp = _pad2d(x, bp, input_size)

    def batch_map(i):
        return (i, 0)

    def param_map(i):
        return (0, 0)

    kernel = _make_kernel(num_layers, split_theta)

    if split_theta:
        out_shape = (jax.ShapeDtypeStruct((bp, bcp), out_dtype),
                     jax.ShapeDtypeStruct((bp, fcp), out_dtype))
        out_specs = (pl.BlockSpec((batch_tile, bcp), batch_map),
                     pl.BlockSpec((batch_tile, fcp), batch_map))
    else:
        out_shape = (jax.ShapeDtypeStruct((bp, tp), out_dtype),)
        out_specs = (pl.BlockSpec((batch_tile, tp), batch_map),)

    ins = [xp] + all_params

    def _call(use_single_buffer):
        def pspec(shape):
            if use_single_buffer:
                # Constant index_map -> one resident copy is enough.
                return pl.BlockSpec(shape, param_map,
                                    pipeline_mode=pl.Buffered(1))
            return pl.BlockSpec(shape, param_map)

        in_specs = ([pl.BlockSpec((batch_tile, input_size), batch_map)]
                    + [pspec(a.shape) for a in all_params])
        return pl.pallas_call(
            kernel,
            out_shape=out_shape,
            grid_spec=pltpu.PrefetchScalarGridSpec(
                num_scalar_prefetch=0,
                grid=(grid_b,),
                in_specs=in_specs,
                out_specs=out_specs,
            ),
            compiler_params=pltpu.CompilerParams(
                dimension_semantics=("parallel",),
                vmem_limit_bytes=vmem_limit),
        )(*ins)

    if single_buffer_params:
        try:
            outs = _call(True)
        except Exception:
            # Robust fallback if this jax version rejects Buffered(1) here.
            outs = _call(False)
    else:
        outs = _call(False)

    # Trim batch / lane padding (cheap XLA slices).
    if split_theta:
        back_p, fore_p = outs
        return back_p[:B, :backcast_size], fore_p[:B, :forecast_size]
    theta_p, = outs
    return (theta_p[:B, :backcast_size],
            theta_p[:B, backcast_size:theta_size])


def _init_linear(key, fan_in, fan_out):
    """PyTorch-style nn.Linear init (uniform +-1/sqrt(fan_in)); weight stored
    as (fan_in, fan_out), bias as (1, fan_out)."""
    kw, kb = jax.random.split(key)
    bound = 1.0 / jnp.sqrt(jnp.float32(fan_in))
    w = jax.random.uniform(kw, (fan_in, fan_out), jnp.float32, -bound, bound)
    b = jax.random.uniform(kb, (1, fan_out), jnp.float32, -bound, bound)
    return w, b


def _reference_forward(x, layer_weights, layer_biases, theta_w, theta_b,
                       backcast_size):
    h = x
    for w, b in zip(layer_weights, layer_biases):
        h = jnp.maximum(h @ w + b, 0.0)
    theta = h @ theta_w + theta_b
    return theta[:, :backcast_size], theta[:, backcast_size:]


if __name__ == "__main__":
    # Module-consistent small shapes.
    input_size = 16          # insample (backcast) length
    forecast_size = 8        # outsample length
    theta_size = input_size + forecast_size   # GenericBasis parameterization
    num_layers = 4
    layer_size = 32

    key = jax.random.PRNGKey(0)
    keys = jax.random.split(key, num_layers + 2)

    layer_weights, layer_biases = [], []
    w, b = _init_linear(keys[0], input_size, layer_size)
    layer_weights.append(w); layer_biases.append(b)
    for i in range(1, num_layers):
        w, b = _init_linear(keys[i], layer_size, layer_size)
        layer_weights.append(w); layer_biases.append(b)
    theta_w, theta_b = _init_linear(keys[num_layers], layer_size, theta_size)

    ok = True

    # Case 1: tiny batch (single grid step, fused theta path), f32 parameters
    # -> tight tolerance vs. the pure-JAX reference.
    x_small = jax.random.normal(keys[num_layers + 1], (8, input_size),
                                jnp.float32)
    back, fore = nbeats_block_forward(
        x_small, layer_weights, layer_biases, theta_w, theta_b,
        backcast_size=input_size, forecast_size=forecast_size,
        param_dtype=jnp.float32)
    jax.block_until_ready((back, fore))
    rb, rf = _reference_forward(x_small, layer_weights, layer_biases,
                                theta_w, theta_b, input_size)
    ok &= back.shape == (8, input_size) and fore.shape == (8, forecast_size)
    ok &= bool(jnp.allclose(back, rb, atol=1e-4, rtol=1e-4))
    ok &= bool(jnp.allclose(fore, rf, atol=1e-4, rtol=1e-4))

    # Case 2: larger batch tiled into 2 grid steps with default bf16 weights /
    # f32 accumulation -> looser tolerance.
    x_big = jax.random.normal(jax.random.PRNGKey(1), (256, input_size),
                              jnp.float32)
    back, fore = nbeats_block_forward(
        x_big, layer_weights, layer_biases, theta_w, theta_b,
        backcast_size=input_size, forecast_size=forecast_size,
        batch_tile=128)
    jax.block_until_ready((back, fore))
    rb, rf = _reference_forward(x_big, layer_weights, layer_biases,
                                theta_w, theta_b, input_size)
    ok &= back.shape == (256, input_size) and fore.shape == (256, forecast_size)
    ok &= bool(jnp.allclose(back, rb, atol=1e-1, rtol=1e-1))
    ok &= bool(jnp.allclose(fore, rf, atol=1e-1, rtol=1e-1))

    if not ok:
        raise SystemExit("MISMATCH")
    print("KERNEL_OK")
</pallas_src>

<mosaic_0001>
module attributes {stable_mosaic.version = 11 : i64} {
  func.func @kernel(%arg0: i32, %arg1: memref<8x16xf32, #tpu.memory_space<vmem>>, %arg2: memref<16x128xf32, #tpu.memory_space<vmem>>, %arg3: memref<1x128xf32, #tpu.memory_space<vmem>>, %arg4: memref<128x128xf32, #tpu.memory_space<vmem>>, %arg5: memref<1x128xf32, #tpu.memory_space<vmem>>, %arg6: memref<128x128xf32, #tpu.memory_space<vmem>>, %arg7: memref<1x128xf32, #tpu.memory_space<vmem>>, %arg8: memref<128x128xf32, #tpu.memory_space<vmem>>, %arg9: memref<1x128xf32, #tpu.memory_space<vmem>>, %arg10: memref<128x128xf32, #tpu.memory_space<vmem>>, %arg11: memref<1x128xf32, #tpu.memory_space<vmem>>, %arg12: memref<8x128xf32, #tpu.memory_space<vmem>>) attributes {dimension_semantics = [#tpu.dimension_semantics<parallel>], iteration_bounds = array<i64: 1>, scalar_prefetch = 0 : i64, scratch_operands = 0 : i64, tpu.core_type = #tpu.core_type<tc>, window_params = [{transform_indices = @transform_0, window_bounds = array<i64: 8, 16>}, {pipeline_mode = #tpu.pipeline_mode<synchronous>, transform_indices = @transform_1, window_bounds = array<i64: 16, 128>}, {pipeline_mode = #tpu.pipeline_mode<synchronous>, transform_indices = @transform_2, window_bounds = array<i64: 1, 128>}, {pipeline_mode = #tpu.pipeline_mode<synchronous>, transform_indices = @transform_3, window_bounds = array<i64: 128, 128>}, {pipeline_mode = #tpu.pipeline_mode<synchronous>, transform_indices = @transform_4, window_bounds = array<i64: 1, 128>}, {pipeline_mode = #tpu.pipeline_mode<synchronous>, transform_indices = @transform_5, window_bounds = array<i64: 128, 128>}, {pipeline_mode = #tpu.pipeline_mode<synchronous>, transform_indices = @transform_6, window_bounds = array<i64: 1, 128>}, {pipeline_mode = #tpu.pipeline_mode<synchronous>, transform_indices = @transform_7, window_bounds = array<i64: 128, 128>}, {pipeline_mode = #tpu.pipeline_mode<synchronous>, transform_indices = @transform_8, window_bounds = array<i64: 1, 128>}, {pipeline_mode = #tpu.pipeline_mode<synchronous>, transform_indices = @transform_9, window_bounds = array<i64: 128, 128>}, {pipeline_mode = #tpu.pipeline_mode<synchronous>, transform_indices = @transform_10, window_bounds = array<i64: 1, 128>}, {transform_indices = @transform_11, window_bounds = array<i64: 8, 128>}]} {
    %c0 = arith.constant 0 : index
    %c0_0 = arith.constant 0 : index
    %0 = vector.load %arg1[%c0, %c0_0] : memref<8x16xf32, #tpu.memory_space<vmem>>, vector<8x16xf32>
    %c0_1 = arith.constant 0 : index
    %c0_2 = arith.constant 0 : index
    %1 = vector.load %arg2[%c0_1, %c0_2] : memref<16x128xf32, #tpu.memory_space<vmem>>, vector<16x128xf32>
    %c0_3 = arith.constant 0 : index
    %c0_4 = arith.constant 0 : index
    %2 = vector.load %arg3[%c0_3, %c0_4] : memref<1x128xf32, #tpu.memory_space<vmem>>, vector<1x128xf32>
    %cst = arith.constant dense<0.000000e+00> : vector<8x128xf32>
    %3 = tpu.matmul %0, %1, %cst {dimension_numbers = #tpu.dot_dimension_numbers<[1], [0], [0], [1], [0, 0, 1, 1], [], []>} : vector<8x16xf32>, vector<16x128xf32>, vector<8x128xf32> -> vector<8x128xf32>
    %4 = vector.broadcast %2 : vector<1x128xf32> to vector<8x128xf32>
    %5 = arith.addf %3, %4 : vector<8x128xf32>
    %cst_5 = arith.constant 0.000000e+00 : f32
    %6 = vector.broadcast %cst_5 : f32 to vector<8x128xf32>
    %7 = arith.maximumf %5, %6 : vector<8x128xf32>
    %c0_6 = arith.constant 0 : index
    %c0_7 = arith.constant 0 : index
    %8 = vector.load %arg4[%c0_6, %c0_7] : memref<128x128xf32, #tpu.memory_space<vmem>>, vector<128x128xf32>
    %c0_8 = arith.constant 0 : index
    %c0_9 = arith.constant 0 : index
    %9 = vector.load %arg5[%c0_8, %c0_9] : memref<1x128xf32, #tpu.memory_space<vmem>>, vector<1x128xf32>
    %cst_10 = arith.constant dense<0.000000e+00> : vector<8x128xf32>
    %10 = tpu.matmul %7, %8, %cst_10 {dimension_numbers = #tpu.dot_dimension_numbers<[1], [0], [0], [1], [0, 0, 1, 1], [], []>} : vector<8x128xf32>, vector<128x128xf32>, vector<8x128xf32> -> vector<8x128xf32>
    %11 = vector.broadcast %9 : vector<1x128xf32> to vector<8x128xf32>
    %12 = arith.addf %10, %11 : vector<8x128xf32>
    %cst_11 = arith.constant 0.000000e+00 : f32
    %13 = vector.broadcast %cst_11 : f32 to vector<8x128xf32>
    %14 = arith.maximumf %12, %13 : vector<8x128xf32>
    %c0_12 = arith.constant 0 : index
    %c0_13 = arith.constant 0 : index
    %15 = vector.load %arg6[%c0_12, %c0_13] : memref<128x128xf32, #tpu.memory_space<vmem>>, vector<128x128xf32>
    %c0_14 = arith.constant 0 : index
    %c0_15 = arith.constant 0 : index
    %16 = vector.load %arg7[%c0_14, %c0_15] : memref<1x128xf32, #tpu.memory_space<vmem>>, vector<1x128xf32>
    %cst_16 = arith.constant dense<0.000000e+00> : vector<8x128xf32>
    %17 = tpu.matmul %14, %15, %cst_16 {dimension_numbers = #tpu.dot_dimension_numbers<[1], [0], [0], [1], [0, 0, 1, 1], [], []>} : vector<8x128xf32>, vector<128x128xf32>, vector<8x128xf32> -> vector<8x128xf32>
    %18 = vector.broadcast %16 : vector<1x128xf32> to vector<8x128xf32>
    %19 = arith.addf %17, %18 : vector<8x128xf32>
    %cst_17 = arith.constant 0.000000e+00 : f32
    %20 = vector.broadcast %cst_17 : f32 to vector<8x128xf32>
    %21 = arith.maximumf %19, %20 : vector<8x128xf32>
    %c0_18 = arith.constant 0 : index
    %c0_19 = arith.constant 0 : index
    %22 = vector.load %arg8[%c0_18, %c0_19] : memref<128x128xf32, #tpu.memory_space<vmem>>, vector<128x128xf32>
    %c0_20 = arith.constant 0 : index
    %c0_21 = arith.constant 0 : index
    %23 = vector.load %arg9[%c0_20, %c0_21] : memref<1x128xf32, #tpu.memory_space<vmem>>, vector<1x128xf32>
    %cst_22 = arith.constant dense<0.000000e+00> : vector<8x128xf32>
    %24 = tpu.matmul %21, %22, %cst_22 {dimension_numbers = #tpu.dot_dimension_numbers<[1], [0], [0], [1], [0, 0, 1, 1], [], []>} : vector<8x128xf32>, vector<128x128xf32>, vector<8x128xf32> -> vector<8x128xf32>
    %25 = vector.broadcast %23 : vector<1x128xf32> to vector<8x128xf32>
    %26 = arith.addf %24, %25 : vector<8x128xf32>
    %cst_23 = arith.constant 0.000000e+00 : f32
    %27 = vector.broadcast %cst_23 : f32 to vector<8x128xf32>
    %28 = arith.maximumf %26, %27 : vector<8x128xf32>
    %c0_24 = arith.constant 0 : index
    %c0_25 = arith.constant 0 : index
    %29 = vector.load %arg10[%c0_24, %c0_25] : memref<128x128xf32, #tpu.memory_space<vmem>>, vector<128x128xf32>
    %cst_26 = arith.constant dense<0.000000e+00> : vector<8x128xf32>
    %30 = tpu.matmul %28, %29, %cst_26 {dimension_numbers = #tpu.dot_dimension_numbers<[1], [0], [0], [1], [0, 0, 1, 1], [], []>} : vector<8x128xf32>, vector<128x128xf32>, vector<8x128xf32> -> vector<8x128xf32>
    %c0_27 = arith.constant 0 : index
    %c0_28 = arith.constant 0 : index
    %31 = vector.load %arg11[%c0_27, %c0_28] : memref<1x128xf32, #tpu.memory_space<vmem>>, vector<1x128xf32>
    %32 = vector.broadcast %31 : vector<1x128xf32> to vector<8x128xf32>
    %33 = arith.addf %30, %32 : vector<8x128xf32>
    %c0_29 = arith.constant 0 : index
    %c0_30 = arith.constant 0 : index
    %34 = vector.load %arg12[%c0_29, %c0_30] : memref<8x128xf32, #tpu.memory_space<vmem>>, vector<8x128xf32>
    tpu.vector_store %arg12[%c0_29, %c0_30], %33 {strides = array<i32>} : memref<8x128xf32, #tpu.memory_space<vmem>>, vector<8x128xf32>,
    return
  }
  func.func @transform_0(%arg0: i32) -> (i32, i32) {
    %c0_i32 = arith.constant 0 : i32
    %c0_i32_0 = arith.constant 0 : i32
    return %arg0, %c0_i32 : i32, i32
  }
  func.func @transform_1(%arg0: i32) -> (i32, i32) {
    %c0_i32 = arith.constant 0 : i32
    %c0_i32_0 = arith.constant 0 : i32
    %c0_i32_1 = arith.constant 0 : i32
    return %c0_i32, %c0_i32_0 : i32, i32
  }
  func.func @transform_2(%arg0: i32) -> (i32, i32) {
    %c0_i32 = arith.constant 0 : i32
    %c0_i32_0 = arith.constant 0 : i32
    %c0_i32_1 = arith.constant 0 : i32
    return %c0_i32, %c0_i32_0 : i32, i32
  }
  func.func @transform_3(%arg0: i32) -> (i32, i32) {
    %c0_i32 = arith.constant 0 : i32
    %c0_i32_0 = arith.constant 0 : i32
    %c0_i32_1 = arith.constant 0 : i32
    return %c0_i32, %c0_i32_0 : i32, i32
  }
  func.func @transform_4(%arg0: i32) -> (i32, i32) {
    %c0_i32 = arith.constant 0 : i32
    %c0_i32_0 = arith.constant 0 : i32
    %c0_i32_1 = arith.constant 0 : i32
    return %c0_i32, %c0_i32_0 : i32, i32
  }
  func.func @transform_5(%arg0: i32) -> (i32, i32) {
    %c0_i32 = arith.constant 0 : i32
    %c0_i32_0 = arith.constant 0 : i32
    %c0_i32_1 = arith.constant 0 : i32
    return %c0_i32, %c0_i32_0 : i32, i32
  }
  func.func @transform_6(%arg0: i32) -> (i32, i32) {
    %c0_i32 = arith.constant 0 : i32
    %c0_i32_0 = arith.constant 0 : i32
    %c0_i32_1 = arith.constant 0 : i32
    return %c0_i32, %c0_i32_0 : i32, i32
  }
  func.func @transform_7(%arg0: i32) -> (i32, i32) {
    %c0_i32 = arith.constant 0 : i32
    %c0_i32_0 = arith.constant 0 : i32
    %c0_i32_1 = arith.constant 0 : i32
    return %c0_i32, %c0_i32_0 : i32, i32
  }
  func.func @transform_8(%arg0: i32) -> (i32, i32) {
    %c0_i32 = arith.constant 0 : i32
    %c0_i32_0 = arith.constant 0 : i32
    %c0_i32_1 = arith.constant 0 : i32
    return %c0_i32, %c0_i32_0 : i32, i32
  }
  func.func @transform_9(%arg0: i32) -> (i32, i32) {
    %c0_i32 = arith.constant 0 : i32
    %c0_i32_0 = arith.constant 0 : i32
    %c0_i32_1 = arith.constant 0 : i32
    return %c0_i32, %c0_i32_0 : i32, i32
  }
  func.func @transform_10(%arg0: i32) -> (i32, i32) {
    %c0_i32 = arith.constant 0 : i32
    %c0_i32_0 = arith.constant 0 : i32
    %c0_i32_1 = arith.constant 0 : i32
    return %c0_i32, %c0_i32_0 : i32, i32
  }
  func.func @transform_11(%arg0: i32) -> (i32, i32) {
    %c0_i32 = arith.constant 0 : i32
    %c0_i32_0 = arith.constant 0 : i32
    return %arg0, %c0_i32 : i32, i32
  }
}

module attributes {stable_mosaic.version = 11 : i64} {
  func.func @kernel(%arg0: i32, %arg1: memref<8x16xf32, #tpu.memory_space<vmem>>, %arg2: memref<16x128xf32, #tpu.memory_space<vmem>>, %arg3: memref<1x128xf32, #tpu.memory_space<vmem>>, %arg4: memref<128x128xf32, #tpu.memory_space<vmem>>, %arg5: memref<1x128xf32, #tpu.memory_space<vmem>>, %arg6: memref<128x128xf32, #tpu.memory_space<vmem>>, %arg7: memref<1x128xf32, #tpu.memory_space<vmem>>, %arg8: memref<128x128xf32, #tpu.memory_space<vmem>>, %arg9: memref<1x128xf32, #tpu.memory_space<vmem>>, %arg10: memref<128x128xf32, #tpu.memory_space<vmem>>, %arg11: memref<1x128xf32, #tpu.memory_space<vmem>>, %arg12: memref<8x128xf32, #tpu.memory_space<vmem>>) attributes {dimension_semantics = [#tpu.dimension_semantics<parallel>], iteration_bounds = array<i64: 1>, scalar_prefetch = 0 : i64, scratch_operands = 0 : i64, tpu.core_type = #tpu.core_type<tc>, window_params = [{transform_indices = @transform_0, window_bounds = array<i64: 8, 16>}, {pipeline_mode = #tpu.pipeline_mode<synchronous>, transform_indices = @transform_1, window_bounds = array<i64: 16, 128>}, {pipeline_mode = #tpu.pipeline_mode<synchronous>, transform_indices = @transform_2, window_bounds = array<i64: 1, 128>}, {pipeline_mode = #tpu.pipeline_mode<synchronous>, transform_indices = @transform_3, window_bounds = array<i64: 128, 128>}, {pipeline_mode = #tpu.pipeline_mode<synchronous>, transform_indices = @transform_4, window_bounds = array<i64: 1, 128>}, {pipeline_mode = #tpu.pipeline_mode<synchronous>, transform_indices = @transform_5, window_bounds = array<i64: 128, 128>}, {pipeline_mode = #tpu.pipeline_mode<synchronous>, transform_indices = @transform_6, window_bounds = array<i64: 1, 128>}, {pipeline_mode = #tpu.pipeline_mode<synchronous>, transform_indices = @transform_7, window_bounds = array<i64: 128, 128>}, {pipeline_mode = #tpu.pipeline_mode<synchronous>, transform_indices = @transform_8, window_bounds = array<i64: 1, 128>}, {pipeline_mode = #tpu.pipeline_mode<synchronous>, transform_indices = @transform_9, window_bounds = array<i64: 128, 128>}, {pipeline_mode = #tpu.pipeline_mode<synchronous>, transform_indices = @transform_10, window_bounds = array<i64: 1, 128>}, {transform_indices = @transform_11, window_bounds = array<i64: 8, 128>}]} {
    %c0 = arith.constant 0 : index
    %c0_0 = arith.constant 0 : index
    %0 = vector.load %arg1[%c0, %c0_0] : memref<8x16xf32, #tpu.memory_space<vmem>>, vector<8x16xf32>
    %c0_1 = arith.constant 0 : index
    %c0_2 = arith.constant 0 : index
    %1 = vector.load %arg2[%c0_1, %c0_2] : memref<16x128xf32, #tpu.memory_space<vmem>>, vector<16x128xf32>
    %c0_3 = arith.constant 0 : index
    %c0_4 = arith.constant 0 : index
    %2 = vector.load %arg3[%c0_3, %c0_4] : memref<1x128xf32, #tpu.memory_space<vmem>>, vector<1x128xf32>
    %cst = arith.constant dense<0.000000e+00> : vector<8x128xf32>
    %3 = tpu.matmul %0, %1, %cst {dimension_numbers = #tpu.dot_dimension_numbers<[1], [0], [0], [1], [0, 0, 1, 1], [], []>} : vector<8x16xf32>, vector<16x128xf32>, vector<8x128xf32> -> vector<8x128xf32>
    %4 = vector.broadcast %2 : vector<1x128xf32> to vector<8x128xf32>
    %5 = arith.addf %3, %4 : vector<8x128xf32>
    %cst_5 = arith.constant 0.000000e+00 : f32
    %6 = vector.broadcast %cst_5 : f32 to vector<8x128xf32>
    %7 = arith.maximumf %5, %6 : vector<8x128xf32>
    %c0_6 = arith.constant 0 : index
    %c0_7 = arith.constant 0 : index
    %8 = vector.load %arg4[%c0_6, %c0_7] : memref<128x128xf32, #tpu.memory_space<vmem>>, vector<128x128xf32>
    %c0_8 = arith.constant 0 : index
    %c0_9 = arith.constant 0 : index
    %9 = vector.load %arg5[%c0_8, %c0_9] : memref<1x128xf32, #tpu.memory_space<vmem>>, vector<1x128xf32>
    %cst_10 = arith.constant dense<0.000000e+00> : vector<8x128xf32>
    %10 = tpu.matmul %7, %8, %cst_10 {dimension_numbers = #tpu.dot_dimension_numbers<[1], [0], [0], [1], [0, 0, 1, 1], [], []>} : vector<8x128xf32>, vector<128x128xf32>, vector<8x128xf32> -> vector<8x128xf32>
    %11 = vector.broadcast %9 : vector<1x128xf32> to vector<8x128xf32>
    %12 = arith.addf %10, %11 : vector<8x128xf32>
    %cst_11 = arith.constant 0.000000e+00 : f32
    %13 = vector.broadcast %cst_11 : f32 to vector<8x128xf32>
    %14 = arith.maximumf %12, %13 : vector<8x128xf32>
    %c0_12 = arith.constant 0 : index
    %c0_13 = arith.constant 0 : index
    %15 = vector.load %arg6[%c0_12, %c0_13] : memref<128x128xf32, #tpu.memory_space<vmem>>, vector<128x128xf32>
    %c0_14 = arith.constant 0 : index
    %c0_15 = arith.constant 0 : index
    %16 = vector.load %arg7[%c0_14, %c0_15] : memref<1x128xf32, #tpu.memory_space<vmem>>, vector<1x128xf32>
    %cst_16 = arith.constant dense<0.000000e+00> : vector<8x128xf32>
    %17 = tpu.matmul %14, %15, %cst_16 {dimension_numbers = #tpu.dot_dimension_numbers<[1], [0], [0], [1], [0, 0, 1, 1], [], []>} : vector<8x128xf32>, vector<128x128xf32>, vector<8x128xf32> -> vector<8x128xf32>
    %18 = vector.broadcast %16 : vector<1x128xf32> to vector<8x128xf32>
    %19 = arith.addf %17, %18 : vector<8x128xf32>
    %cst_17 = arith.constant 0.000000e+00 : f32
    %20 = vector.broadcast %cst_17 : f32 to vector<8x128xf32>
    %21 = arith.maximumf %19, %20 : vector<8x128xf32>
    %c0_18 = arith.constant 0 : index
    %c0_19 = arith.constant 0 : index
    %22 = vector.load %arg8[%c0_18, %c0_19] : memref<128x128xf32, #tpu.memory_space<vmem>>, vector<128x128xf32>
    %c0_20 = arith.constant 0 : index
    %c0_21 = arith.constant 0 : index
    %23 = vector.load %arg9[%c0_20, %c0_21] : memref<1x128xf32, #tpu.memory_space<vmem>>, vector<1x128xf32>
    %cst_22 = arith.constant dense<0.000000e+00> : vector<8x128xf32>
    %24 = tpu.matmul %21, %22, %cst_22 {dimension_numbers = #tpu.dot_dimension_numbers<[1], [0], [0], [1], [0, 0, 1, 1], [], []>} : vector<8x128xf32>, vector<128x128xf32>, vector<8x128xf32> -> vector<8x128xf32>
    %25 = vector.broadcast %23 : vector<1x128xf32> to vector<8x128xf32>
    %26 = arith.addf %24, %25 : vector<8x128xf32>
    %cst_23 = arith.constant 0.000000e+00 : f32
    %27 = vector.broadcast %cst_23 : f32 to vector<8x128xf32>
    %28 = arith.maximumf %26, %27 : vector<8x128xf32>
    %c0_24 = arith.constant 0 : index
    %c0_25 = arith.constant 0 : index
    %29 = vector.load %arg10[%c0_24, %c0_25] : memref<128x128xf32, #tpu.memory_space<vmem>>, vector<128x128xf32>
    %cst_26 = arith.constant dense<0.000000e+00> : vector<8x128xf32>
    %30 = tpu.matmul %28, %29, %cst_26 {dimension_numbers = #tpu.dot_dimension_numbers<[1], [0], [0], [1], [0, 0, 1, 1], [], []>} : vector<8x128xf32>, vector<128x128xf32>, vector<8x128xf32> -> vector<8x128xf32>
    %c0_27 = arith.constant 0 : index
    %c0_28 = arith.constant 0 : index
    %31 = vector.load %arg11[%c0_27, %c0_28] : memref<1x128xf32, #tpu.memory_space<vmem>>, vector<1x128xf32>
    %32 = vector.broadcast %31 : vector<1x128xf32> to vector<8x128xf32>
    %33 = arith.addf %30, %32 : vector<8x128xf32>
    %c0_29 = arith.constant 0 : index
    %c0_30 = arith.constant 0 : index
    %34 = vector.load %arg12[%c0_29, %c0_30] : memref<8x128xf32, #tpu.memory_space<vmem>>, vector<8x128xf32>
    tpu.vector_store %arg12[%c0_29, %c0_30], %33 {strides = array<i32>} : memref<8x128xf32, #tpu.memory_space<vmem>>, vector<8x128xf32>,
    return
  }
  func.func @transform_0(%arg0: i32) -> (i32, i32) {
    %c0_i32 = arith.constant 0 : i32
    %c0_i32_0 = arith.constant 0 : i32
    return %arg0, %c0_i32 : i32, i32
  }
  func.func @transform_1(%arg0: i32) -> (i32, i32) {
    %c0_i32 = arith.constant 0 : i32
    %c0_i32_0 = arith.constant 0 : i32
    %c0_i32_1 = arith.constant 0 : i32
    return %c0_i32, %c0_i32_0 : i32, i32
  }
  func.func @transform_2(%arg0: i32) -> (i32, i32) {
    %c0_i32 = arith.constant 0 : i32
    %c0_i32_0 = arith.constant 0 : i32
    %c0_i32_1 = arith.constant 0 : i32
    return %c0_i32, %c0_i32_0 : i32, i32
  }
  func.func @transform_3(%arg0: i32) -> (i32, i32) {
    %c0_i32 = arith.constant 0 : i32
    %c0_i32_0 = arith.constant 0 : i32
    %c0_i32_1 = arith.constant 0 : i32
    return %c0_i32, %c0_i32_0 : i32, i32
  }
  func.func @transform_4(%arg0: i32) -> (i32, i32) {
    %c0_i32 = arith.constant 0 : i32
    %c0_i32_0 = arith.constant 0 : i32
    %c0_i32_1 = arith.constant 0 : i32
    return %c0_i32, %c0_i32_0 : i32, i32
  }
  func.func @transform_5(%arg0: i32) -> (i32, i32) {
    %c0_i32 = arith.constant 0 : i32
    %c0_i32_0 = arith.constant 0 : i32
    %c0_i32_1 = arith.constant 0 : i32
    return %c0_i32, %c0_i32_0 : i32, i32
  }
  func.func @transform_6(%arg0: i32) -> (i32, i32) {
    %c0_i32 = arith.constant 0 : i32
    %c0_i32_0 = arith.constant 0 : i32
    %c0_i32_1 = arith.constant 0 : i32
    return %c0_i32, %c0_i32_0 : i32, i32
  }
  func.func @transform_7(%arg0: i32) -> (i32, i32) {
    %c0_i32 = arith.constant 0 : i32
    %c0_i32_0 = arith.constant 0 : i32
    %c0_i32_1 = arith.constant 0 : i32
    return %c0_i32, %c0_i32_0 : i32, i32
  }
  func.func @transform_8(%arg0: i32) -> (i32, i32) {
    %c0_i32 = arith.constant 0 : i32
    %c0_i32_0 = arith.constant 0 : i32
    %c0_i32_1 = arith.constant 0 : i32
    return %c0_i32, %c0_i32_0 : i32, i32
  }
  func.func @transform_9(%arg0: i32) -> (i32, i32) {
    %c0_i32 = arith.constant 0 : i32
    %c0_i32_0 = arith.constant 0 : i32
    %c0_i32_1 = arith.constant 0 : i32
    return %c0_i32, %c0_i32_0 : i32, i32
  }
  func.func @transform_10(%arg0: i32) -> (i32, i32) {
    %c0_i32 = arith.constant 0 : i32
    %c0_i32_0 = arith.constant 0 : i32
    %c0_i32_1 = arith.constant 0 : i32
    return %c0_i32, %c0_i32_0 : i32, i32
  }
  func.func @transform_11(%arg0: i32) -> (i32, i32) {
    %c0_i32 = arith.constant 0 : i32
    %c0_i32_0 = arith.constant 0 : i32
    return %arg0, %c0_i32 : i32, i32
  }
}

</mosaic_0001>

<llo_original>
// kernel: tpu_custom_call.1
$region0: #{tpu_custom_call.1}
  #allocation0 [shape = 'u32[]', space=smem, size = 0x4, offset = 0x4, fixed_abs, tag = 'smem constant byte address 0x4 - core index']
  #allocation1 [shape = 'u32[144,128]{1,0:T(1,128)}', space=vmem, size = 0x12000, scoped, tag = 'internal scratch']
  %s0 = inlined_call_operand.hbm [shape: f32[8,16], index: 0, kind: input, shape index: {}]
  %s1 = inlined_call_operand.hbm [shape: f32[16,128], index: 1, kind: input, shape index: {}]
  %s2 = inlined_call_operand.vmem [shape: f32[1,128], index: 2, kind: input, shape index: {}]
  %s3 = inlined_call_operand.hbm [shape: f32[128,128], index: 3, kind: input, shape index: {}]
  %s4 = inlined_call_operand.vmem [shape: f32[1,128], index: 4, kind: input, shape index: {}]
  %s5 = inlined_call_operand.hbm [shape: f32[128,128], index: 5, kind: input, shape index: {}]
  %s6 = inlined_call_operand.vmem [shape: f32[1,128], index: 6, kind: input, shape index: {}]
  %s7 = inlined_call_operand.hbm [shape: f32[128,128], index: 7, kind: input, shape index: {}]
  %s8 = inlined_call_operand.vmem [shape: f32[1,128], index: 8, kind: input, shape index: {}]
  %s9 = inlined_call_operand.hbm [shape: f32[128,128], index: 9, kind: input, shape index: {}]
  %s10 = inlined_call_operand.vmem [shape: f32[1,128], index: 10, kind: input, shape index: {}]
  %s11 = inlined_call_operand.hbm [shape: f32[8,128], index: 11, kind: output, shape index: {}]
  %s12 = sld [smem:[#allocation0]]
  $region78: #{tpu_custom_call.1} parent=0
    _
  %s14 = ssub.s32 1, %s12
  %s15 = scalar_select 0, %s14, %s12
  $region1: #{tpu_custom_call.1} parent=0
    #allocation2 [shape = 'u8[4096]{0}', space=vmem, size = 0x1000, scoped, tag = 'input window, operand 0, single buffered']
    #allocation3 [shape = 's32[1]{0}', space=sflag, size = 0x4, scoped, tag = 'scoped memory for tpu_custom_call.1']
    #allocation4 [shape = 's32[1]{0}', space=sflag, size = 0x4, scoped, tag = 'scoped memory for tpu_custom_call.1']
    #allocation5 [shape = 'u8[8192]{0}', space=vmem, size = 0x2000, scoped, tag = 'input window, operand 1, single buffered']
    #allocation6 [shape = 's32[1]{0}', space=sflag, size = 0x4, scoped, tag = 'scoped memory for tpu_custom_call.1']
    #allocation7 [shape = 'u8[65536]{0}', space=vmem, size = 0x10000, scoped, tag = 'input window, operand 3, single buffered']
    #allocation8 [shape = 'u8[65536]{0}', space=vmem, size = 0x10000, scoped, tag = 'input window, operand 5, single buffered']
    #allocation9 [shape = 's32[1]{0}', space=sflag, size = 0x4, scoped, tag = 'scoped memory for tpu_custom_call.1']
    #allocation10 [shape = 'u8[65536]{0}', space=vmem, size = 0x10000, scoped, tag = 'input window, operand 7, single buffered']
    #allocation11 [shape = 'u8[65536]{0}', space=vmem, size = 0x10000, scoped, tag = 'input window, operand 9, single buffered']
    #allocation12 [shape = 's32[1]{0}', space=sflag, size = 0x4, scoped, tag = 'scoped memory for tpu_custom_call.1']
    #allocation13 [shape = 'u8[4096]{0}', space=vmem, size = 0x1000, scoped, tag = 'output window, operand 0, single buffered']
    %16 = vsyncpa [#allocation3], 0
    %17 = vsyncpa [#allocation6], 0
    %18 = vsyncpa [#allocation9], 0
    %19 = vsyncpa [#allocation12], 0
    %20 = vsyncpa [#allocation4], 0
    // Predicated region
    $region2: #{tpu_custom_call.1} parent=1 // pred_check
      _
    $region3: #{tpu_custom_call.1} parent=1 // pred_check_branch
      %22 = sbr.rel (0) target = $region5
    $region4: #{tpu_custom_call.1} parent=1 // pred_region
      %s24 = ssub.s32 128, 128
      %25 = vsyncadd [#allocation3], %s24
      %s27 = sshll.u32 [#allocation2], 4
      %s28 = int_to_ptr.vmem [resolvable:$true] %s27
      %30 = dma.hbm_to_vmem [thread:$0]  %s0, 128, %s28, [#allocation3]
    $region5: #{tpu_custom_call.1} parent=1 // pred_fallthru
      _
    // Predicated region
    $region6: #{tpu_custom_call.1} parent=1 // pred_check
      _
    $region7: #{tpu_custom_call.1} parent=1 // pred_check_branch
      %32 = sbr.rel (0) target = $region9
    $region8: #{tpu_custom_call.1} parent=1 // pred_region
      %s34 = ssub.s32 256, 256
      %35 = vsyncadd [#allocation6], %s34
      %s36 = sshll.u32 [#allocation5], 4
      %s37 = int_to_ptr.vmem [resolvable:$true] %s36
      %42 = dma.hbm_to_vmem [thread:$0]  %s1, 256, %s37, [#allocation6], 128, 128, 8
    $region9: #{tpu_custom_call.1} parent=1 // pred_fallthru
      _
    // Predicated region
    $region10: #{tpu_custom_call.1} parent=1 // pred_check
      _
    $region11: #{tpu_custom_call.1} parent=1 // pred_check_branch
      %44 = sbr.rel (0) target = $region13
    $region12: #{tpu_custom_call.1} parent=1 // pred_region
      _
    $region13: #{tpu_custom_call.1} parent=1 // pred_fallthru
      _
    // Predicated region
    $region14: #{tpu_custom_call.1} parent=1 // pred_check
      _
    $region15: #{tpu_custom_call.1} parent=1 // pred_check_branch
      %46 = sbr.rel (0) target = $region17
    $region16: #{tpu_custom_call.1} parent=1 // pred_region
      %s48 = ssub.s32 2048, 2048
      %49 = vsyncadd [#allocation6], %s48
      %s50 = sshll.u32 [#allocation7], 4
      %s51 = int_to_ptr.vmem [resolvable:$true] %s50
      %56 = dma.hbm_to_vmem [thread:$0]  %s3, 2048, %s51, [#allocation6], 128, 128, 8
    $region17: #{tpu_custom_call.1} parent=1 // pred_fallthru
      _
    // Predicated region
    $region18: #{tpu_custom_call.1} parent=1 // pred_check
      _
    $region19: #{tpu_custom_call.1} parent=1 // pred_check_branch
      %58 = sbr.rel (0) target = $region21
    $region20: #{tpu_custom_call.1} parent=1 // pred_region
      _
    $region21: #{tpu_custom_call.1} parent=1 // pred_fallthru
      _
    // Predicated region
    $region22: #{tpu_custom_call.1} parent=1 // pred_check
      _
    $region23: #{tpu_custom_call.1} parent=1 // pred_check_branch
      %60 = sbr.rel (0) target = $region25
    $region24: #{tpu_custom_call.1} parent=1 // pred_region
      %s62 = ssub.s32 2048, 2048
      %63 = vsyncadd [#allocation9], %s62
      %s64 = sshll.u32 [#allocation8], 4
      %s65 = int_to_ptr.vmem [resolvable:$true] %s64
      %70 = dma.hbm_to_vmem [thread:$0]  %s5, 2048, %s65, [#allocation9], 128, 128, 8
    $region25: #{tpu_custom_call.1} parent=1 // pred_fallthru
      _
    // Predicated region
    $region26: #{tpu_custom_call.1} parent=1 // pred_check
      _
    $region27: #{tpu_custom_call.1} parent=1 // pred_check_branch
      %72 = sbr.rel (0) target = $region29
    $region28: #{tpu_custom_call.1} parent=1 // pred_region
      _
    $region29: #{tpu_custom_call.1} parent=1 // pred_fallthru
      _
    // Predicated region
    $region30: #{tpu_custom_call.1} parent=1 // pred_check
      _
    $region31: #{tpu_custom_call.1} parent=1 // pred_check_branch
      %74 = sbr.rel (0) target = $region33
    $region32: #{tpu_custom_call.1} parent=1 // pred_region
      %s76 = ssub.s32 2048, 2048
      %77 = vsyncadd [#allocation9], %s76
      %s78 = sshll.u32 [#allocation10], 4
      %s79 = int_to_ptr.vmem [resolvable:$true] %s78
      %84 = dma.hbm_to_vmem [thread:$0]  %s7, 2048, %s79, [#allocation9], 128, 128, 8
    $region33: #{tpu_custom_call.1} parent=1 // pred_fallthru
      _
    // Predicated region
    $region34: #{tpu_custom_call.1} parent=1 // pred_check
      _
    $region35: #{tpu_custom_call.1} parent=1 // pred_check_branch
      %86 = sbr.rel (0) target = $region37
    $region36: #{tpu_custom_call.1} parent=1 // pred_region
      _
    $region37: #{tpu_custom_call.1} parent=1 // pred_fallthru
      _
    // Predicated region
    $region38: #{tpu_custom_call.1} parent=1 // pred_check
      _
    $region39: #{tpu_custom_call.1} parent=1 // pred_check_branch
      %88 = sbr.rel (0) target = $region41
    $region40: #{tpu_custom_call.1} parent=1 // pred_region
      %s90 = ssub.s32 2048, 2048
      %91 = vsyncadd [#allocation12], %s90
      %s92 = sshll.u32 [#allocation11], 4
      %s93 = int_to_ptr.vmem [resolvable:$true] %s92
      %98 = dma.hbm_to_vmem [thread:$0]  %s9, 2048, %s93, [#allocation12], 128, 128, 8
    $region41: #{tpu_custom_call.1} parent=1 // pred_fallthru
      _
    // Predicated region
    $region42: #{tpu_custom_call.1} parent=1 // pred_check
      _
    $region43: #{tpu_custom_call.1} parent=1 // pred_check_branch
      %100 = sbr.rel (0) target = $region45
    $region44: #{tpu_custom_call.1} parent=1 // pred_region
      _
    $region45: #{tpu_custom_call.1} parent=1 // pred_fallthru
      _
    // Predicated region
    $region46: #{tpu_custom_call.1} parent=1 // pred_check
      _
    $region47: #{tpu_custom_call.1} parent=1 // pred_check_branch
      %102 = sbr.rel (0) target = $region49
    $region48: #{tpu_custom_call.1} parent=1 // pred_region
      %103 = dma.done [#allocation3], 128
    $region49: #{tpu_custom_call.1} parent=1 // pred_fallthru
      _
    // Predicated region
    $region50: #{tpu_custom_call.1} parent=1 // pred_check
      _
    $region51: #{tpu_custom_call.1} parent=1 // pred_check_branch
      %105 = sbr.rel (0) target = $region53
    $region52: #{tpu_custom_call.1} parent=1 // pred_region
      %106 = dma.done [#allocation6], 256
    $region53: #{tpu_custom_call.1} parent=1 // pred_fallthru
      _
    // Predicated region
    $region54: #{tpu_custom_call.1} parent=1 // pred_check
      _
    $region55: #{tpu_custom_call.1} parent=1 // pred_check_branch
      %108 = sbr.rel (0) target = $region57
    $region56: #{tpu_custom_call.1} parent=1 // pred_region
      %109 = dma.done [#allocation6], 2048
    $region57: #{tpu_custom_call.1} parent=1 // pred_fallthru
      _
    // Predicated region
    $region58: #{tpu_custom_call.1} parent=1 // pred_check
      _
    $region59: #{tpu_custom_call.1} parent=1 // pred_check_branch
      %111 = sbr.rel (0) target = $region61
    $region60: #{tpu_custom_call.1} parent=1 // pred_region
      %112 = dma.done [#allocation9], 2048
    $region61: #{tpu_custom_call.1} parent=1 // pred_fallthru
      _
    // Predicated region
    $region62: #{tpu_custom_call.1} parent=1 // pred_check
      _
    $region63: #{tpu_custom_call.1} parent=1 // pred_check_branch
      %114 = sbr.rel (0) target = $region65
    $region64: #{tpu_custom_call.1} parent=1 // pred_region
      %115 = dma.done [#allocation9], 2048
    $region65: #{tpu_custom_call.1} parent=1 // pred_fallthru
      _
    // Predicated region
    $region66: #{tpu_custom_call.1} parent=1 // pred_check
      _
    $region67: #{tpu_custom_call.1} parent=1 // pred_check_branch
      %117 = sbr.rel (0) target = $region69
    $region68: #{tpu_custom_call.1} parent=1 // pred_region
      %118 = dma.done [#allocation12], 2048
    $region69: #{tpu_custom_call.1} parent=1 // pred_fallthru
      _
    %v119 = vld [vmem:[#allocation2] sm:$0xff]
    %v120 = vld [vmem:[#allocation5] sm:$0xff]
    %v121 = vld [vmem:[#allocation5 + $0x8] sm:$0xff]
    %v122 = vld [vmem:[%s2] sm:$0x1]
    %v124 = vlaneseq
    %v125 = vshrl.u32 %v124, 7
    %v126 = vsub.s32 0, %v125
    %v127 = vrot.slane %v122, %v126
    %vm129 = vcmask 130048
    %v131 = vsel %vm129, %v119, 0
    %133 = vmatprep.subr.mxu0 0.0
    %134 = vmatpush1.msra.mxu0 %v120
    %135 = vmatprep.subr.mxu0 0.0
    %136 = vmatpush1.msra.mxu0 %v121
    %137 = vmatprep.subr.mxu0 0.0
    %138 = vmatpush1.msra.mxu0 0.0
    %139 = vmatprep.subr.mxu0 0.0
    %140 = vmatpush1.msra.mxu0 0.0
    %141 = vmatprep.subr.mxu0 0.0
    %142 = vmatpush1.msra.mxu0 0.0
    %143 = vmatprep.subr.mxu0 0.0
    %144 = vmatpush1.msra.mxu0 0.0
    %145 = vmatprep.subr.mxu0 0.0
    %146 = vmatpush1.msra.mxu0 0.0
    %147 = vmatprep.subr.mxu0 0.0
    %148 = vmatpush1.msra.mxu0 0.0
    %149 = vmatprep.subr.mxu0 0.0
    %150 = vmatpush1.msra.mxu0 0.0
    %151 = vmatprep.subr.mxu0 0.0
    %152 = vmatpush1.msra.mxu0 0.0
    %153 = vmatprep.subr.mxu0 0.0
    %154 = vmatpush1.msra.mxu0 0.0
    %155 = vmatprep.subr.mxu0 0.0
    %156 = vmatpush1.msra.mxu0 0.0
    %157 = vmatprep.subr.mxu0 0.0
    %158 = vmatpush1.msra.mxu0 0.0
    %159 = vmatprep.subr.mxu0 0.0
    %160 = vmatpush1.msra.mxu0 0.0
    %161 = vmatprep.subr.mxu0 0.0
    %162 = vmatpush1.msra.mxu0 0.0
    %163 = vmatprep.subr.mxu0 0.0
    %164 = vmatpush1.msra.mxu0 0.0
    %165 = vmatprep.subr.mxu0 0.0
    %166 = vmatpush1.msra.mxu0 0.0
    %167 = vmatprep.subr.mxu0 0.0
    %168 = vmatpush1.msra.mxu0 0.0
    %169 = vmatprep.subr.mxu0 0.0
    %170 = vmatpush1.msra.mxu0 0.0
    %171 = vmatprep.subr.mxu0 0.0
    %172 = vmatpush1.msra.mxu0 0.0
    %173 = vmatprep.subr.mxu0 0.0
    %174 = vmatpush1.msra.mxu0 0.0
    %175 = vmatprep.subr.mxu0 0.0
    %176 = vmatpush1.msra.mxu0 0.0
    %177 = vmatprep.subr.mxu0 0.0
    %178 = vmatpush1.msra.mxu0 0.0
    %179 = vmatprep.subr.mxu0 0.0
    %180 = vmatpush1.msra.mxu0 0.0
    %181 = vmatprep.subr.mxu0 0.0
    %182 = vmatpush1.msra.mxu0 0.0
    %183 = vmatprep.subr.mxu0 0.0
    %184 = vmatpush1.msra.mxu0 0.0
    %185 = vmatprep.subr.mxu0 0.0
    %186 = vmatpush1.msra.mxu0 0.0
    %187 = vmatprep.subr.mxu0 0.0
    %188 = vmatpush1.msra.mxu0 0.0
    %189 = vmatprep.subr.mxu0 0.0
    %190 = vmatpush1.msra.mxu0 0.0
    %191 = vmatprep.subr.mxu0 0.0
    %192 = vmatpush1.msra.mxu0 0.0
    %193 = vmatprep.subr.mxu0 0.0
    %194 = vmatpush1.msra.mxu0 0.0
    %195 = vmatprep.subr.mxu0 0.0
    %196 = vmatpush1.msra.mxu0 0.0
    %197 = vmatprep.mubr.f32.mxu0 0.0
    %198 = vmatmul.mubr.f32.gmra.mrb[0].mxu0 %v131
    %v199 = vpop.f32.mrb[0].mxu0
    %v200 = vadd.f32 %v127, %v199
    %v201 = vpop.f32.mrb[0].mxu0
    %202 = vdwg.mxu0
    %v203 = vmax.f32 %v200, 0.0
    %v204 = vld [vmem:[#allocation7] sm:$0xff]
    %v205 = vld [vmem:[#allocation7 + $0x8] sm:$0xff]
    %v206 = vld [vmem:[#allocation7 + $0x10] sm:$0xff]
    %v207 = vld [vmem:[#allocation7 + $0x18] sm:$0xff]
    %v208 = vld [vmem:[#allocation7 + $0x20] sm:$0xff]
    %v209 = vld [vmem:[#allocation7 + $0x28] sm:$0xff]
    %v210 = vld [vmem:[#allocation7 + $0x30] sm:$0xff]
    %v211 = vld [vmem:[#allocation7 + $0x38] sm:$0xff]
    %v212 = vld [vmem:[#allocation7 + $0x40] sm:$0xff]
    %v213 = vld [vmem:[#allocation7 + $0x48] sm:$0xff]
    %v214 = vld [vmem:[#allocation7 + $0x50] sm:$0xff]
    %v215 = vld [vmem:[#allocation7 + $0x58] sm:$0xff]
    %v216 = vld [vmem:[#allocation7 + $0x60] sm:$0xff]
    %v217 = vld [vmem:[#allocation7 + $0x68] sm:$0xff]
    %v218 = vld [vmem:[#allocation7 + $0x70] sm:$0xff]
    %v219 = vld [vmem:[#allocation7 + $0x78] sm:$0xff]
    %v220 = vld [vmem:[%s4] sm:$0x1]
    %v222 = vlaneseq
    %v223 = vshrl.u32 %v222, 7
    %v224 = vsub.s32 0, %v223
    %v225 = vrot.slane %v220, %v224
    %227 = vmatprep.subr.mxu0 0.0
    %228 = vmatpush1.msra.mxu0 %v204
    %229 = vmatprep.subr.mxu0 0.0
    %230 = vmatpush1.msra.mxu0 %v205
    %231 = vmatprep.subr.mxu0 0.0
    %232 = vmatpush1.msra.mxu0 %v206
    %233 = vmatprep.subr.mxu0 0.0
    %234 = vmatpush1.msra.mxu0 %v207
    %235 = vmatprep.subr.mxu0 0.0
    %236 = vmatpush1.msra.mxu0 %v208
    %237 = vmatprep.subr.mxu0 0.0
    %238 = vmatpush1.msra.mxu0 %v209
    %239 = vmatprep.subr.mxu0 0.0
    %240 = vmatpush1.msra.mxu0 %v210
    %241 = vmatprep.subr.mxu0 0.0
    %242 = vmatpush1.msra.mxu0 %v211
    %243 = vmatprep.subr.mxu0 0.0
    %244 = vmatpush1.msra.mxu0 %v212
    %245 = vmatprep.subr.mxu0 0.0
    %246 = vmatpush1.msra.mxu0 %v213
    %247 = vmatprep.subr.mxu0 0.0
    %248 = vmatpush1.msra.mxu0 %v214
    %249 = vmatprep.subr.mxu0 0.0
    %250 = vmatpush1.msra.mxu0 %v215
    %251 = vmatprep.subr.mxu0 0.0
    %252 = vmatpush1.msra.mxu0 %v216
    %253 = vmatprep.subr.mxu0 0.0
    %254 = vmatpush1.msra.mxu0 %v217
    %255 = vmatprep.subr.mxu0 0.0
    %256 = vmatpush1.msra.mxu0 %v218
    %257 = vmatprep.subr.mxu0 0.0
    %258 = vmatpush1.msra.mxu0 %v219
    %259 = vmatprep.subr.mxu0 0.0
    %260 = vmatpush1.msra.mxu0 0.0
    %261 = vmatprep.subr.mxu0 0.0
    %262 = vmatpush1.msra.mxu0 0.0
    %263 = vmatprep.subr.mxu0 0.0
    %264 = vmatpush1.msra.mxu0 0.0
    %265 = vmatprep.subr.mxu0 0.0
    %266 = vmatpush1.msra.mxu0 0.0
    %267 = vmatprep.subr.mxu0 0.0
    %268 = vmatpush1.msra.mxu0 0.0
    %269 = vmatprep.subr.mxu0 0.0
    %270 = vmatpush1.msra.mxu0 0.0
    %271 = vmatprep.subr.mxu0 0.0
    %272 = vmatpush1.msra.mxu0 0.0
    %273 = vmatprep.subr.mxu0 0.0
    %274 = vmatpush1.msra.mxu0 0.0
    %275 = vmatprep.subr.mxu0 0.0
    %276 = vmatpush1.msra.mxu0 0.0
    %277 = vmatprep.subr.mxu0 0.0
    %278 = vmatpush1.msra.mxu0 0.0
    %279 = vmatprep.subr.mxu0 0.0
    %280 = vmatpush1.msra.mxu0 0.0
    %281 = vmatprep.subr.mxu0 0.0
    %282 = vmatpush1.msra.mxu0 0.0
    %283 = vmatprep.subr.mxu0 0.0
    %284 = vmatpush1.msra.mxu0 0.0
    %285 = vmatprep.subr.mxu0 0.0
    %286 = vmatpush1.msra.mxu0 0.0
    %287 = vmatprep.subr.mxu0 0.0
    %288 = vmatpush1.msra.mxu0 0.0
    %289 = vmatprep.subr.mxu0 0.0
    %290 = vmatpush1.msra.mxu0 0.0
    %291 = vmatprep.mubr.f32.mxu0 0.0
    %292 = vmatmul.mubr.f32.gmra.mrb[0].mxu0 %v203
    %v293 = vpop.f32.mrb[0].mxu0
    %v294 = vadd.f32 %v225, %v293
    %v295 = vpop.f32.mrb[0].mxu0
    %296 = vdwg.mxu0
    %v297 = vmax.f32 %v294, 0.0
    %v298 = vld [vmem:[#allocation8] sm:$0xff]
    %v299 = vld [vmem:[#allocation8 + $0x8] sm:$0xff]
    %v300 = vld [vmem:[#allocation8 + $0x10] sm:$0xff]
    %v301 = vld [vmem:[#allocation8 + $0x18] sm:$0xff]
    %v302 = vld [vmem:[#allocation8 + $0x20] sm:$0xff]
    %v303 = vld [vmem:[#allocation8 + $0x28] sm:$0xff]
    %v304 = vld [vmem:[#allocation8 + $0x30] sm:$0xff]
    %v305 = vld [vmem:[#allocation8 + $0x38] sm:$0xff]
    %v306 = vld [vmem:[#allocation8 + $0x40] sm:$0xff]
    %v307 = vld [vmem:[#allocation8 + $0x48] sm:$0xff]
    %v308 = vld [vmem:[#allocation8 + $0x50] sm:$0xff]
    %v309 = vld [vmem:[#allocation8 + $0x58] sm:$0xff]
    %v310 = vld [vmem:[#allocation8 + $0x60] sm:$0xff]
    %v311 = vld [vmem:[#allocation8 + $0x68] sm:$0xff]
    %v312 = vld [vmem:[#allocation8 + $0x70] sm:$0xff]
    %v313 = vld [vmem:[#allocation8 + $0x78] sm:$0xff]
    %v314 = vld [vmem:[%s6] sm:$0x1]
    %v316 = vlaneseq
    %v317 = vshrl.u32 %v316, 7
    %v318 = vsub.s32 0, %v317
    %v319 = vrot.slane %v314, %v318
    %321 = vmatprep.subr.mxu0 0.0
    %322 = vmatpush1.msra.mxu0 %v298
    %323 = vmatprep.subr.mxu0 0.0
    %324 = vmatpush1.msra.mxu0 %v299
    %325 = vmatprep.subr.mxu0 0.0
    %326 = vmatpush1.msra.mxu0 %v300
    %327 = vmatprep.subr.mxu0 0.0
    %328 = vmatpush1.msra.mxu0 %v301
    %329 = vmatprep.subr.mxu0 0.0
    %330 = vmatpush1.msra.mxu0 %v302
    %331 = vmatprep.subr.mxu0 0.0
    %332 = vmatpush1.msra.mxu0 %v303
    %333 = vmatprep.subr.mxu0 0.0
    %334 = vmatpush1.msra.mxu0 %v304
    %335 = vmatprep.subr.mxu0 0.0
    %336 = vmatpush1.msra.mxu0 %v305
    %337 = vmatprep.subr.mxu0 0.0
    %338 = vmatpush1.msra.mxu0 %v306
    %339 = vmatprep.subr.mxu0 0.0
    %340 = vmatpush1.msra.mxu0 %v307
    %341 = vmatprep.subr.mxu0 0.0
    %342 = vmatpush1.msra.mxu0 %v308
    %343 = vmatprep.subr.mxu0 0.0
    %344 = vmatpush1.msra.mxu0 %v309
    %345 = vmatprep.subr.mxu0 0.0
    %346 = vmatpush1.msra.mxu0 %v310
    %347 = vmatprep.subr.mxu0 0.0
    %348 = vmatpush1.msra.mxu0 %v311
    %349 = vmatprep.subr.mxu0 0.0
    %350 = vmatpush1.msra.mxu0 %v312
    %351 = vmatprep.subr.mxu0 0.0
    %352 = vmatpush1.msra.mxu0 %v313
    %353 = vmatprep.subr.mxu0 0.0
    %354 = vmatpush1.msra.mxu0 0.0
    %355 = vmatprep.subr.mxu0 0.0
    %356 = vmatpush1.msra.mxu0 0.0
    %357 = vmatprep.subr.mxu0 0.0
    %358 = vmatpush1.msra.mxu0 0.0
    %359 = vmatprep.subr.mxu0 0.0
    %360 = vmatpush1.msra.mxu0 0.0
    %361 = vmatprep.subr.mxu0 0.0
    %362 = vmatpush1.msra.mxu0 0.0
    %363 = vmatprep.subr.mxu0 0.0
    %364 = vmatpush1.msra.mxu0 0.0
    %365 = vmatprep.subr.mxu0 0.0
    %366 = vmatpush1.msra.mxu0 0.0
    %367 = vmatprep.subr.mxu0 0.0
    %368 = vmatpush1.msra.mxu0 0.0
    %369 = vmatprep.subr.mxu0 0.0
    %370 = vmatpush1.msra.mxu0 0.0
    %371 = vmatprep.subr.mxu0 0.0
    %372 = vmatpush1.msra.mxu0 0.0
    %373 = vmatprep.subr.mxu0 0.0
    %374 = vmatpush1.msra.mxu0 0.0
    %375 = vmatprep.subr.mxu0 0.0
    %376 = vmatpush1.msra.mxu0 0.0
    %377 = vmatprep.subr.mxu0 0.0
    %378 = vmatpush1.msra.mxu0 0.0
    %379 = vmatprep.subr.mxu0 0.0
    %380 = vmatpush1.msra.mxu0 0.0
    %381 = vmatprep.subr.mxu0 0.0
    %382 = vmatpush1.msra.mxu0 0.0
    %383 = vmatprep.subr.mxu0 0.0
    %384 = vmatpush1.msra.mxu0 0.0
    %385 = vmatprep.mubr.f32.mxu0 0.0
    %386 = vmatmul.mubr.f32.gmra.mrb[0].mxu0 %v297
    %v387 = vpop.f32.mrb[0].mxu0
    %v388 = vadd.f32 %v319, %v387
    %v389 = vpop.f32.mrb[0].mxu0
    %390 = vdwg.mxu0
    %v391 = vmax.f32 %v388, 0.0
    %v392 = vld [vmem:[#allocation10] sm:$0xff]
    %v393 = vld [vmem:[#allocation10 + $0x8] sm:$0xff]
    %v394 = vld [vmem:[#allocation10 + $0x10] sm:$0xff]
    %v395 = vld [vmem:[#allocation10 + $0x18] sm:$0xff]
    %v396 = vld [vmem:[#allocation10 + $0x20] sm:$0xff]
    %v397 = vld [vmem:[#allocation10 + $0x28] sm:$0xff]
    %v398 = vld [vmem:[#allocation10 + $0x30] sm:$0xff]
    %v399 = vld [vmem:[#allocation10 + $0x38] sm:$0xff]
    %v400 = vld [vmem:[#allocation10 + $0x40] sm:$0xff]
    %v401 = vld [vmem:[#allocation10 + $0x48] sm:$0xff]
    %v402 = vld [vmem:[#allocation10 + $0x50] sm:$0xff]
    %v403 = vld [vmem:[#allocation10 + $0x58] sm:$0xff]
    %v404 = vld [vmem:[#allocation10 + $0x60] sm:$0xff]
    %v405 = vld [vmem:[#allocation10 + $0x68] sm:$0xff]
    %v406 = vld [vmem:[#allocation10 + $0x70] sm:$0xff]
    %v407 = vld [vmem:[#allocation10 + $0x78] sm:$0xff]
    %v408 = vld [vmem:[%s8] sm:$0x1]
    %v410 = vlaneseq
    %v411 = vshrl.u32 %v410, 7
    %v412 = vsub.s32 0, %v411
    %v413 = vrot.slane %v408, %v412
    %415 = vmatprep.subr.mxu0 0.0
    %416 = vmatpush1.msra.mxu0 %v392
    %417 = vmatprep.subr.mxu0 0.0
    %418 = vmatpush1.msra.mxu0 %v393
    %419 = vmatprep.subr.mxu0 0.0
    %420 = vmatpush1.msra.mxu0 %v394
    %421 = vmatprep.subr.mxu0 0.0
    %422 = vmatpush1.msra.mxu0 %v395
    %423 = vmatprep.subr.mxu0 0.0
    %424 = vmatpush1.msra.mxu0 %v396
    %425 = vmatprep.subr.mxu0 0.0
    %426 = vmatpush1.msra.mxu0 %v397
    %427 = vmatprep.subr.mxu0 0.0
    %428 = vmatpush1.msra.mxu0 %v398
    %429 = vmatprep.subr.mxu0 0.0
    %430 = vmatpush1.msra.mxu0 %v399
    %431 = vmatprep.subr.mxu0 0.0
    %432 = vmatpush1.msra.mxu0 %v400
    %433 = vmatprep.subr.mxu0 0.0
    %434 = vmatpush1.msra.mxu0 %v401
    %435 = vmatprep.subr.mxu0 0.0
    %436 = vmatpush1.msra.mxu0 %v402
    %437 = vmatprep.subr.mxu0 0.0
    %438 = vmatpush1.msra.mxu0 %v403
    %439 = vmatprep.subr.mxu0 0.0
    %440 = vmatpush1.msra.mxu0 %v404
    %441 = vmatprep.subr.mxu0 0.0
    %442 = vmatpush1.msra.mxu0 %v405
    %443 = vmatprep.subr.mxu0 0.0
    %444 = vmatpush1.msra.mxu0 %v406
    %445 = vmatprep.subr.mxu0 0.0
    %446 = vmatpush1.msra.mxu0 %v407
    %447 = vmatprep.subr.mxu0 0.0
    %448 = vmatpush1.msra.mxu0 0.0
    %449 = vmatprep.subr.mxu0 0.0
    %450 = vmatpush1.msra.mxu0 0.0
    %451 = vmatprep.subr.mxu0 0.0
    %452 = vmatpush1.msra.mxu0 0.0
    %453 = vmatprep.subr.mxu0 0.0
    %454 = vmatpush1.msra.mxu0 0.0
    %455 = vmatprep.subr.mxu0 0.0
    %456 = vmatpush1.msra.mxu0 0.0
    %457 = vmatprep.subr.mxu0 0.0
    %458 = vmatpush1.msra.mxu0 0.0
    %459 = vmatprep.subr.mxu0 0.0
    %460 = vmatpush1.msra.mxu0 0.0
    %461 = vmatprep.subr.mxu0 0.0
    %462 = vmatpush1.msra.mxu0 0.0
    %463 = vmatprep.subr.mxu0 0.0
    %464 = vmatpush1.msra.mxu0 0.0
    %465 = vmatprep.subr.mxu0 0.0
    %466 = vmatpush1.msra.mxu0 0.0
    %467 = vmatprep.subr.mxu0 0.0
    %468 = vmatpush1.msra.mxu0 0.0
    %469 = vmatprep.subr.mxu0 0.0
    %470 = vmatpush1.msra.mxu0 0.0
    %471 = vmatprep.subr.mxu0 0.0
    %472 = vmatpush1.msra.mxu0 0.0
    %473 = vmatprep.subr.mxu0 0.0
    %474 = vmatpush1.msra.mxu0 0.0
    %475 = vmatprep.subr.mxu0 0.0
    %476 = vmatpush1.msra.mxu0 0.0
    %477 = vmatprep.subr.mxu0 0.0
    %478 = vmatpush1.msra.mxu0 0.0
    %479 = vmatprep.mubr.f32.mxu0 0.0
    %480 = vmatmul.mubr.f32.gmra.mrb[0].mxu0 %v391
    %v481 = vpop.f32.mrb[0].mxu0
    %v482 = vadd.f32 %v413, %v481
    %v483 = vpop.f32.mrb[0].mxu0
    %484 = vdwg.mxu0
    %v485 = vmax.f32 %v482, 0.0
    %v486 = vld [vmem:[#allocation11] sm:$0xff]
    %v487 = vld [vmem:[#allocation11 + $0x8] sm:$0xff]
    %v488 = vld [vmem:[#allocation11 + $0x10] sm:$0xff]
    %v489 = vld [vmem:[#allocation11 + $0x18] sm:$0xff]
    %v490 = vld [vmem:[#allocation11 + $0x20] sm:$0xff]
    %v491 = vld [vmem:[#allocation11 + $0x28] sm:$0xff]
    %v492 = vld [vmem:[#allocation11 + $0x30] sm:$0xff]
    %v493 = vld [vmem:[#allocation11 + $0x38] sm:$0xff]
    %v494 = vld [vmem:[#allocation11 + $0x40] sm:$0xff]
    %v495 = vld [vmem:[#allocation11 + $0x48] sm:$0xff]
    %v496 = vld [vmem:[#allocation11 + $0x50] sm:$0xff]
    %v497 = vld [vmem:[#allocation11 + $0x58] sm:$0xff]
    %v498 = vld [vmem:[#allocation11 + $0x60] sm:$0xff]
    %v499 = vld [vmem:[#allocation11 + $0x68] sm:$0xff]
    %v500 = vld [vmem:[#allocation11 + $0x70] sm:$0xff]
    %v501 = vld [vmem:[#allocation11 + $0x78] sm:$0xff]
    %v502 = vld [vmem:[%s10] sm:$0x1]
    %v504 = vlaneseq
    %v505 = vshrl.u32 %v504, 7
    %v506 = vsub.s32 0, %v505
    %v507 = vrot.slane %v502, %v506
    %509 = vmatprep.subr.mxu0 0.0
    %510 = vmatpush1.msra.mxu0 %v486
    %511 = vmatprep.subr.mxu0 0.0
    %512 = vmatpush1.msra.mxu0 %v487
    %513 = vmatprep.subr.mxu0 0.0
    %514 = vmatpush1.msra.mxu0 %v488
    %515 = vmatprep.subr.mxu0 0.0
    %516 = vmatpush1.msra.mxu0 %v489
    %517 = vmatprep.subr.mxu0 0.0
    %518 = vmatpush1.msra.mxu0 %v490
    %519 = vmatprep.subr.mxu0 0.0
    %520 = vmatpush1.msra.mxu0 %v491
    %521 = vmatprep.subr.mxu0 0.0
    %522 = vmatpush1.msra.mxu0 %v492
    %523 = vmatprep.subr.mxu0 0.0
    %524 = vmatpush1.msra.mxu0 %v493
    %525 = vmatprep.subr.mxu0 0.0
    %526 = vmatpush1.msra.mxu0 %v494
    %527 = vmatprep.subr.mxu0 0.0
    %528 = vmatpush1.msra.mxu0 %v495
    %529 = vmatprep.subr.mxu0 0.0
    %530 = vmatpush1.msra.mxu0 %v496
    %531 = vmatprep.subr.mxu0 0.0
    %532 = vmatpush1.msra.mxu0 %v497
    %533 = vmatprep.subr.mxu0 0.0
    %534 = vmatpush1.msra.mxu0 %v498
    %535 = vmatprep.subr.mxu0 0.0
    %536 = vmatpush1.msra.mxu0 %v499
    %537 = vmatprep.subr.mxu0 0.0
    %538 = vmatpush1.msra.mxu0 %v500
    %539 = vmatprep.subr.mxu0 0.0
    %540 = vmatpush1.msra.mxu0 %v501
    %541 = vmatprep.subr.mxu0 0.0
    %542 = vmatpush1.msra.mxu0 0.0
    %543 = vmatprep.subr.mxu0 0.0
    %544 = vmatpush1.msra.mxu0 0.0
    %545 = vmatprep.subr.mxu0 0.0
    %546 = vmatpush1.msra.mxu0 0.0
    %547 = vmatprep.subr.mxu0 0.0
    %548 = vmatpush1.msra.mxu0 0.0
    %549 = vmatprep.subr.mxu0 0.0
    %550 = vmatpush1.msra.mxu0 0.0
    %551 = vmatprep.subr.mxu0 0.0
    %552 = vmatpush1.msra.mxu0 0.0
    %553 = vmatprep.subr.mxu0 0.0
    %554 = vmatpush1.msra.mxu0 0.0
    %555 = vmatprep.subr.mxu0 0.0
    %556 = vmatpush1.msra.mxu0 0.0
    %557 = vmatprep.subr.mxu0 0.0
    %558 = vmatpush1.msra.mxu0 0.0
    %559 = vmatprep.subr.mxu0 0.0
    %560 = vmatpush1.msra.mxu0 0.0
    %561 = vmatprep.subr.mxu0 0.0
    %562 = vmatpush1.msra.mxu0 0.0
    %563 = vmatprep.subr.mxu0 0.0
    %564 = vmatpush1.msra.mxu0 0.0
    %565 = vmatprep.subr.mxu0 0.0
    %566 = vmatpush1.msra.mxu0 0.0
    %567 = vmatprep.subr.mxu0 0.0
    %568 = vmatpush1.msra.mxu0 0.0
    %569 = vmatprep.subr.mxu0 0.0
    %570 = vmatpush1.msra.mxu0 0.0
    %571 = vmatprep.subr.mxu0 0.0
    %572 = vmatpush1.msra.mxu0 0.0
    %573 = vmatprep.mubr.f32.mxu0 0.0
    %574 = vmatmul.mubr.f32.gmra.mrb[0].mxu0 %v485
    %v575 = vpop.f32.mrb[0].mxu0
    %v576 = vadd.f32 %v507, %v575
    %v577 = vpop.f32.mrb[0].mxu0
    %578 = vdwg.mxu0
    %579 = vst [vmem:[#allocation13] sm:$0xff] %v576
    // Predicated region
    $region70: #{tpu_custom_call.1} parent=1 // pred_check
      _
    $region71: #{tpu_custom_call.1} parent=1 // pred_check_branch
      %581 = sbr.rel (0) target = $region73
    $region72: #{tpu_custom_call.1} parent=1 // pred_region
      %s583 = ssub.s32 128, 128
      %584 = vsyncadd [#allocation4], %s583
      %s586 = sshll.u32 [#allocation13], 4
      %s587 = int_to_ptr.vmem [resolvable:$true] %s586
      %589 = dma.vmem_to_hbm [thread:$0]  %s587, 128, %s11, [#allocation4]
    $region73: #{tpu_custom_call.1} parent=1 // pred_fallthru
      _
    // Predicated region
    $region74: #{tpu_custom_call.1} parent=1 // pred_check
      _
    $region75: #{tpu_custom_call.1} parent=1 // pred_check_branch
      %591 = sbr.rel (0) target = $region77
    $region76: #{tpu_custom_call.1} parent=1 // pred_region
      %592 = dma.done [#allocation4], 128
    $region77: #{tpu_custom_call.1} parent=1 // pred_fallthru
      _
    %593 = vsyncpa [#allocation3], 1
    %594 = vsyncpa [#allocation6], 1
    %595 = vsyncpa [#allocation9], 1
    %596 = vsyncpa [#allocation12], 1
    %597 = vsyncpa [#allocation4], 1

// kernel: tpu_custom_call.1
$region0: #{tpu_custom_call.1}
  #allocation0 [shape = 'u32[]', space=smem, size = 0x4, offset = 0x4, fixed_abs, tag = 'smem constant byte address 0x4 - core index']
  #allocation1 [shape = 'u32[144,128]{1,0:T(1,128)}', space=vmem, size = 0x12000, scoped, tag = 'internal scratch']
  %s0 = inlined_call_operand.hbm [shape: f32[8,16], index: 0, kind: input, shape index: {}]
  %s1 = inlined_call_operand.hbm [shape: f32[16,128], index: 1, kind: input, shape index: {}]
  %s2 = inlined_call_operand.vmem [shape: f32[1,128], index: 2, kind: input, shape index: {}]
  %s3 = inlined_call_operand.hbm [shape: f32[128,128], index: 3, kind: input, shape index: {}]
  %s4 = inlined_call_operand.vmem [shape: f32[1,128], index: 4, kind: input, shape index: {}]
  %s5 = inlined_call_operand.hbm [shape: f32[128,128], index: 5, kind: input, shape index: {}]
  %s6 = inlined_call_operand.vmem [shape: f32[1,128], index: 6, kind: input, shape index: {}]
  %s7 = inlined_call_operand.hbm [shape: f32[128,128], index: 7, kind: input, shape index: {}]
  %s8 = inlined_call_operand.vmem [shape: f32[1,128], index: 8, kind: input, shape index: {}]
  %s9 = inlined_call_operand.hbm [shape: f32[128,128], index: 9, kind: input, shape index: {}]
  %s10 = inlined_call_operand.vmem [shape: f32[1,128], index: 10, kind: input, shape index: {}]
  %s11 = inlined_call_operand.hbm [shape: f32[8,128], index: 11, kind: output, shape index: {}]
  %s12 = sld [smem:[#allocation0]]
  $region78: #{tpu_custom_call.1} parent=0
    _
  %s14 = ssub.s32 1, %s12
  %s15 = scalar_select 0, %s14, %s12
  $region1: #{tpu_custom_call.1} parent=0
    #allocation2 [shape = 'u8[4096]{0}', space=vmem, size = 0x1000, scoped, tag = 'input window, operand 0, single buffered']
    #allocation3 [shape = 's32[1]{0}', space=sflag, size = 0x4, scoped, tag = 'scoped memory for tpu_custom_call.1']
    #allocation4 [shape = 's32[1]{0}', space=sflag, size = 0x4, scoped, tag = 'scoped memory for tpu_custom_call.1']
    #allocation5 [shape = 'u8[8192]{0}', space=vmem, size = 0x2000, scoped, tag = 'input window, operand 1, single buffered']
    #allocation6 [shape = 's32[1]{0}', space=sflag, size = 0x4, scoped, tag = 'scoped memory for tpu_custom_call.1']
    #allocation7 [shape = 'u8[65536]{0}', space=vmem, size = 0x10000, scoped, tag = 'input window, operand 3, single buffered']
    #allocation8 [shape = 'u8[65536]{0}', space=vmem, size = 0x10000, scoped, tag = 'input window, operand 5, single buffered']
    #allocation9 [shape = 's32[1]{0}', space=sflag, size = 0x4, scoped, tag = 'scoped memory for tpu_custom_call.1']
    #allocation10 [shape = 'u8[65536]{0}', space=vmem, size = 0x10000, scoped, tag = 'input window, operand 7, single buffered']
    #allocation11 [shape = 'u8[65536]{0}', space=vmem, size = 0x10000, scoped, tag = 'input window, operand 9, single buffered']
    #allocation12 [shape = 's32[1]{0}', space=sflag, size = 0x4, scoped, tag = 'scoped memory for tpu_custom_call.1']
    #allocation13 [shape = 'u8[4096]{0}', space=vmem, size = 0x1000, scoped, tag = 'output window, operand 0, single buffered']
    %16 = vsyncpa [#allocation3], 0
    %17 = vsyncpa [#allocation6], 0
    %18 = vsyncpa [#allocation9], 0
    %19 = vsyncpa [#allocation12], 0
    %20 = vsyncpa [#allocation4], 0
    // Predicated region
    $region2: #{tpu_custom_call.1} parent=1 // pred_check
      _
    $region3: #{tpu_custom_call.1} parent=1 // pred_check_branch
      %22 = sbr.rel (0) target = $region5
    $region4: #{tpu_custom_call.1} parent=1 // pred_region
      %s24 = ssub.s32 128, 128
      %25 = vsyncadd [#allocation3], %s24
      %s27 = sshll.u32 [#allocation2], 4
      %s28 = int_to_ptr.vmem [resolvable:$true] %s27
      %30 = dma.hbm_to_vmem [thread:$0]  %s0, 128, %s28, [#allocation3]
    $region5: #{tpu_custom_call.1} parent=1 // pred_fallthru
      _
    // Predicated region
    $region6: #{tpu_custom_call.1} parent=1 // pred_check
      _
    $region7: #{tpu_custom_call.1} parent=1 // pred_check_branch
      %32 = sbr.rel (0) target = $region9
    $region8: #{tpu_custom_call.1} parent=1 // pred_region
      %s34 = ssub.s32 256, 256
      %35 = vsyncadd [#allocation6], %s34
      %s36 = sshll.u32 [#allocation5], 4
      %s37 = int_to_ptr.vmem [resolvable:$true] %s36
      %42 = dma.hbm_to_vmem [thread:$0]  %s1, 256, %s37, [#allocation6], 128, 128, 8
    $region9: #{tpu_custom_call.1} parent=1 // pred_fallthru
      _
    // Predicated region
    $region10: #{tpu_custom_call.1} parent=1 // pred_check
      _
    $region11: #{tpu_custom_call.1} parent=1 // pred_check_branch
      %44 = sbr.rel (0) target = $region13
    $region12: #{tpu_custom_call.1} parent=1 // pred_region
      _
    $region13: #{tpu_custom_call.1} parent=1 // pred_fallthru
      _
    // Predicated region
    $region14: #{tpu_custom_call.1} parent=1 // pred_check
      _
    $region15: #{tpu_custom_call.1} parent=1 // pred_check_branch
      %46 = sbr.rel (0) target = $region17
    $region16: #{tpu_custom_call.1} parent=1 // pred_region
      %s48 = ssub.s32 2048, 2048
      %49 = vsyncadd [#allocation6], %s48
      %s50 = sshll.u32 [#allocation7], 4
      %s51 = int_to_ptr.vmem [resolvable:$true] %s50
      %56 = dma.hbm_to_vmem [thread:$0]  %s3, 2048, %s51, [#allocation6], 128, 128, 8
    $region17: #{tpu_custom_call.1} parent=1 // pred_fallthru
      _
    // Predicated region
    $region18: #{tpu_custom_call.1} parent=1 // pred_check
      _
    $region19: #{tpu_custom_call.1} parent=1 // pred_check_branch
      %58 = sbr.rel (0) target = $region21
    $region20: #{tpu_custom_call.1} parent=1 // pred_region
      _
    $region21: #{tpu_custom_call.1} parent=1 // pred_fallthru
      _
    // Predicated region
    $region22: #{tpu_custom_call.1} parent=1 // pred_check
      _
    $region23: #{tpu_custom_call.1} parent=1 // pred_check_branch
      %60 = sbr.rel (0) target = $region25
    $region24: #{tpu_custom_call.1} parent=1 // pred_region
      %s62 = ssub.s32 2048, 2048
      %63 = vsyncadd [#allocation9], %s62
      %s64 = sshll.u32 [#allocation8], 4
      %s65 = int_to_ptr.vmem [resolvable:$true] %s64
      %70 = dma.hbm_to_vmem [thread:$0]  %s5, 2048, %s65, [#allocation9], 128, 128, 8
    $region25: #{tpu_custom_call.1} parent=1 // pred_fallthru
      _
    // Predicated region
    $region26: #{tpu_custom_call.1} parent=1 // pred_check
      _
    $region27: #{tpu_custom_call.1} parent=1 // pred_check_branch
      %72 = sbr.rel (0) target = $region29
    $region28: #{tpu_custom_call.1} parent=1 // pred_region
      _
    $region29: #{tpu_custom_call.1} parent=1 // pred_fallthru
      _
    // Predicated region
    $region30: #{tpu_custom_call.1} parent=1 // pred_check
      _
    $region31: #{tpu_custom_call.1} parent=1 // pred_check_branch
      %74 = sbr.rel (0) target = $region33
    $region32: #{tpu_custom_call.1} parent=1 // pred_region
      %s76 = ssub.s32 2048, 2048
      %77 = vsyncadd [#allocation9], %s76
      %s78 = sshll.u32 [#allocation10], 4
      %s79 = int_to_ptr.vmem [resolvable:$true] %s78
      %84 = dma.hbm_to_vmem [thread:$0]  %s7, 2048, %s79, [#allocation9], 128, 128, 8
    $region33: #{tpu_custom_call.1} parent=1 // pred_fallthru
      _
    // Predicated region
    $region34: #{tpu_custom_call.1} parent=1 // pred_check
      _
    $region35: #{tpu_custom_call.1} parent=1 // pred_check_branch
      %86 = sbr.rel (0) target = $region37
    $region36: #{tpu_custom_call.1} parent=1 // pred_region
      _
    $region37: #{tpu_custom_call.1} parent=1 // pred_fallthru
      _
    // Predicated region
    $region38: #{tpu_custom_call.1} parent=1 // pred_check
      _
    $region39: #{tpu_custom_call.1} parent=1 // pred_check_branch
      %88 = sbr.rel (0) target = $region41
    $region40: #{tpu_custom_call.1} parent=1 // pred_region
      %s90 = ssub.s32 2048, 2048
      %91 = vsyncadd [#allocation12], %s90
      %s92 = sshll.u32 [#allocation11], 4
      %s93 = int_to_ptr.vmem [resolvable:$true] %s92
      %98 = dma.hbm_to_vmem [thread:$0]  %s9, 2048, %s93, [#allocation12], 128, 128, 8
    $region41: #{tpu_custom_call.1} parent=1 // pred_fallthru
      _
    // Predicated region
    $region42: #{tpu_custom_call.1} parent=1 // pred_check
      _
    $region43: #{tpu_custom_call.1} parent=1 // pred_check_branch
      %100 = sbr.rel (0) target = $region45
    $region44: #{tpu_custom_call.1} parent=1 // pred_region
      _
    $region45: #{tpu_custom_call.1} parent=1 // pred_fallthru
      _
    // Predicated region
    $region46: #{tpu_custom_call.1} parent=1 // pred_check
      _
    $region47: #{tpu_custom_call.1} parent=1 // pred_check_branch
      %102 = sbr.rel (0) target = $region49
    $region48: #{tpu_custom_call.1} parent=1 // pred_region
      %103 = dma.done [#allocation3], 128
    $region49: #{tpu_custom_call.1} parent=1 // pred_fallthru
      _
    // Predicated region
    $region50: #{tpu_custom_call.1} parent=1 // pred_check
      _
    $region51: #{tpu_custom_call.1} parent=1 // pred_check_branch
      %105 = sbr.rel (0) target = $region53
    $region52: #{tpu_custom_call.1} parent=1 // pred_region
      %106 = dma.done [#allocation6], 256
    $region53: #{tpu_custom_call.1} parent=1 // pred_fallthru
      _
    // Predicated region
    $region54: #{tpu_custom_call.1} parent=1 // pred_check
      _
    $region55: #{tpu_custom_call.1} parent=1 // pred_check_branch
      %108 = sbr.rel (0) target = $region57
    $region56: #{tpu_custom_call.1} parent=1 // pred_region
      %109 = dma.done [#allocation6], 2048
    $region57: #{tpu_custom_call.1} parent=1 // pred_fallthru
      _
    // Predicated region
    $region58: #{tpu_custom_call.1} parent=1 // pred_check
      _
    $region59: #{tpu_custom_call.1} parent=1 // pred_check_branch
      %111 = sbr.rel (0) target = $region61
    $region60: #{tpu_custom_call.1} parent=1 // pred_region
      %112 = dma.done [#allocation9], 2048
    $region61: #{tpu_custom_call.1} parent=1 // pred_fallthru
      _
    // Predicated region
    $region62: #{tpu_custom_call.1} parent=1 // pred_check
      _
    $region63: #{tpu_custom_call.1} parent=1 // pred_check_branch
      %114 = sbr.rel (0) target = $region65
    $region64: #{tpu_custom_call.1} parent=1 // pred_region
      %115 = dma.done [#allocation9], 2048
    $region65: #{tpu_custom_call.1} parent=1 // pred_fallthru
      _
    // Predicated region
    $region66: #{tpu_custom_call.1} parent=1 // pred_check
      _
    $region67: #{tpu_custom_call.1} parent=1 // pred_check_branch
      %117 = sbr.rel (0) target = $region69
    $region68: #{tpu_custom_call.1} parent=1 // pred_region
      %118 = dma.done [#allocation12], 2048
    $region69: #{tpu_custom_call.1} parent=1 // pred_fallthru
      _
    %v119 = vld [vmem:[#allocation2] sm:$0xff]
    %v120 = vld [vmem:[#allocation5] sm:$0xff]
    %v121 = vld [vmem:[#allocation5 + $0x8] sm:$0xff]
    %v122 = vld [vmem:[%s2] sm:$0x1]
    %v124 = vlaneseq
    %v125 = vshrl.u32 %v124, 7
    %v126 = vsub.s32 0, %v125
    %v127 = vrot.slane %v122, %v126
    %vm129 = vcmask 130048
    %v131 = vsel %vm129, %v119, 0
    %133 = vmatprep.subr.mxu0 0.0
    %134 = vmatpush1.msra.mxu0 %v120
    %135 = vmatprep.subr.mxu0 0.0
    %136 = vmatpush1.msra.mxu0 %v121
    %137 = vmatprep.subr.mxu0 0.0
    %138 = vmatpush1.msra.mxu0 0.0
    %139 = vmatprep.subr.mxu0 0.0
    %140 = vmatpush1.msra.mxu0 0.0
    %141 = vmatprep.subr.mxu0 0.0
    %142 = vmatpush1.msra.mxu0 0.0
    %143 = vmatprep.subr.mxu0 0.0
    %144 = vmatpush1.msra.mxu0 0.0
    %145 = vmatprep.subr.mxu0 0.0
    %146 = vmatpush1.msra.mxu0 0.0
    %147 = vmatprep.subr.mxu0 0.0
    %148 = vmatpush1.msra.mxu0 0.0
    %149 = vmatprep.subr.mxu0 0.0
    %150 = vmatpush1.msra.mxu0 0.0
    %151 = vmatprep.subr.mxu0 0.0
    %152 = vmatpush1.msra.mxu0 0.0
    %153 = vmatprep.subr.mxu0 0.0
    %154 = vmatpush1.msra.mxu0 0.0
    %155 = vmatprep.subr.mxu0 0.0
    %156 = vmatpush1.msra.mxu0 0.0
    %157 = vmatprep.subr.mxu0 0.0
    %158 = vmatpush1.msra.mxu0 0.0
    %159 = vmatprep.subr.mxu0 0.0
    %160 = vmatpush1.msra.mxu0 0.0
    %161 = vmatprep.subr.mxu0 0.0
    %162 = vmatpush1.msra.mxu0 0.0
    %163 = vmatprep.subr.mxu0 0.0
    %164 = vmatpush1.msra.mxu0 0.0
    %165 = vmatprep.subr.mxu0 0.0
    %166 = vmatpush1.msra.mxu0 0.0
    %167 = vmatprep.subr.mxu0 0.0
    %168 = vmatpush1.msra.mxu0 0.0
    %169 = vmatprep.subr.mxu0 0.0
    %170 = vmatpush1.msra.mxu0 0.0
    %171 = vmatprep.subr.mxu0 0.0
    %172 = vmatpush1.msra.mxu0 0.0
    %173 = vmatprep.subr.mxu0 0.0
    %174 = vmatpush1.msra.mxu0 0.0
    %175 = vmatprep.subr.mxu0 0.0
    %176 = vmatpush1.msra.mxu0 0.0
    %177 = vmatprep.subr.mxu0 0.0
    %178 = vmatpush1.msra.mxu0 0.0
    %179 = vmatprep.subr.mxu0 0.0
    %180 = vmatpush1.msra.mxu0 0.0
    %181 = vmatprep.subr.mxu0 0.0
    %182 = vmatpush1.msra.mxu0 0.0
    %183 = vmatprep.subr.mxu0 0.0
    %184 = vmatpush1.msra.mxu0 0.0
    %185 = vmatprep.subr.mxu0 0.0
    %186 = vmatpush1.msra.mxu0 0.0
    %187 = vmatprep.subr.mxu0 0.0
    %188 = vmatpush1.msra.mxu0 0.0
    %189 = vmatprep.subr.mxu0 0.0
    %190 = vmatpush1.msra.mxu0 0.0
    %191 = vmatprep.subr.mxu0 0.0
    %192 = vmatpush1.msra.mxu0 0.0
    %193 = vmatprep.subr.mxu0 0.0
    %194 = vmatpush1.msra.mxu0 0.0
    %195 = vmatprep.subr.mxu0 0.0
    %196 = vmatpush1.msra.mxu0 0.0
    %197 = vmatprep.mubr.f32.mxu0 0.0
    %198 = vmatmul.mubr.f32.gmra.mrb[0].mxu0 %v131
    %v199 = vpop.f32.mrb[0].mxu0
    %v200 = vadd.f32 %v127, %v199
    %v201 = vpop.f32.mrb[0].mxu0
    %202 = vdwg.mxu0
    %v203 = vmax.f32 %v200, 0.0
    %v204 = vld [vmem:[#allocation7] sm:$0xff]
    %v205 = vld [vmem:[#allocation7 + $0x8] sm:$0xff]
    %v206 = vld [vmem:[#allocation7 + $0x10] sm:$0xff]
    %v207 = vld [vmem:[#allocation7 + $0x18] sm:$0xff]
    %v208 = vld [vmem:[#allocation7 + $0x20] sm:$0xff]
    %v209 = vld [vmem:[#allocation7 + $0x28] sm:$0xff]
    %v210 = vld [vmem:[#allocation7 + $0x30] sm:$0xff]
    %v211 = vld [vmem:[#allocation7 + $0x38] sm:$0xff]
    %v212 = vld [vmem:[#allocation7 + $0x40] sm:$0xff]
    %v213 = vld [vmem:[#allocation7 + $0x48] sm:$0xff]
    %v214 = vld [vmem:[#allocation7 + $0x50] sm:$0xff]
    %v215 = vld [vmem:[#allocation7 + $0x58] sm:$0xff]
    %v216 = vld [vmem:[#allocation7 + $0x60] sm:$0xff]
    %v217 = vld [vmem:[#allocation7 + $0x68] sm:$0xff]
    %v218 = vld [vmem:[#allocation7 + $0x70] sm:$0xff]
    %v219 = vld [vmem:[#allocation7 + $0x78] sm:$0xff]
    %v220 = vld [vmem:[%s4] sm:$0x1]
    %v222 = vlaneseq
    %v223 = vshrl.u32 %v222, 7
    %v224 = vsub.s32 0, %v223
    %v225 = vrot.slane %v220, %v224
    %227 = vmatprep.subr.mxu0 0.0
    %228 = vmatpush1.msra.mxu0 %v204
    %229 = vmatprep.subr.mxu0 0.0
    %230 = vmatpush1.msra.mxu0 %v205
    %231 = vmatprep.subr.mxu0 0.0
    %232 = vmatpush1.msra.mxu0 %v206
    %233 = vmatprep.subr.mxu0 0.0
    %234 = vmatpush1.msra.mxu0 %v207
    %235 = vmatprep.subr.mxu0 0.0
    %236 = vmatpush1.msra.mxu0 %v208
    %237 = vmatprep.subr.mxu0 0.0
    %238 = vmatpush1.msra.mxu0 %v209
    %239 = vmatprep.subr.mxu0 0.0
    %240 = vmatpush1.msra.mxu0 %v210
    %241 = vmatprep.subr.mxu0 0.0
    %242 = vmatpush1.msra.mxu0 %v211
    %243 = vmatprep.subr.mxu0 0.0
    %244 = vmatpush1.msra.mxu0 %v212
    %245 = vmatprep.subr.mxu0 0.0
    %246 = vmatpush1.msra.mxu0 %v213
    %247 = vmatprep.subr.mxu0 0.0
    %248 = vmatpush1.msra.mxu0 %v214
    %249 = vmatprep.subr.mxu0 0.0
    %250 = vmatpush1.msra.mxu0 %v215
    %251 = vmatprep.subr.mxu0 0.0
    %252 = vmatpush1.msra.mxu0 %v216
    %253 = vmatprep.subr.mxu0 0.0
    %254 = vmatpush1.msra.mxu0 %v217
    %255 = vmatprep.subr.mxu0 0.0
    %256 = vmatpush1.msra.mxu0 %v218
    %257 = vmatprep.subr.mxu0 0.0
    %258 = vmatpush1.msra.mxu0 %v219
    %259 = vmatprep.subr.mxu0 0.0
    %260 = vmatpush1.msra.mxu0 0.0
    %261 = vmatprep.subr.mxu0 0.0
    %262 = vmatpush1.msra.mxu0 0.0
    %263 = vmatprep.subr.mxu0 0.0
    %264 = vmatpush1.msra.mxu0 0.0
    %265 = vmatprep.subr.mxu0 0.0
    %266 = vmatpush1.msra.mxu0 0.0
    %267 = vmatprep.subr.mxu0 0.0
    %268 = vmatpush1.msra.mxu0 0.0
    %269 = vmatprep.subr.mxu0 0.0
    %270 = vmatpush1.msra.mxu0 0.0
    %271 = vmatprep.subr.mxu0 0.0
    %272 = vmatpush1.msra.mxu0 0.0
    %273 = vmatprep.subr.mxu0 0.0
    %274 = vmatpush1.msra.mxu0 0.0
    %275 = vmatprep.subr.mxu0 0.0
    %276 = vmatpush1.msra.mxu0 0.0
    %277 = vmatprep.subr.mxu0 0.0
    %278 = vmatpush1.msra.mxu0 0.0
    %279 = vmatprep.subr.mxu0 0.0
    %280 = vmatpush1.msra.mxu0 0.0
    %281 = vmatprep.subr.mxu0 0.0
    %282 = vmatpush1.msra.mxu0 0.0
    %283 = vmatprep.subr.mxu0 0.0
    %284 = vmatpush1.msra.mxu0 0.0
    %285 = vmatprep.subr.mxu0 0.0
    %286 = vmatpush1.msra.mxu0 0.0
    %287 = vmatprep.subr.mxu0 0.0
    %288 = vmatpush1.msra.mxu0 0.0
    %289 = vmatprep.subr.mxu0 0.0
    %290 = vmatpush1.msra.mxu0 0.0
    %291 = vmatprep.mubr.f32.mxu0 0.0
    %292 = vmatmul.mubr.f32.gmra.mrb[0].mxu0 %v203
    %v293 = vpop.f32.mrb[0].mxu0
    %v294 = vadd.f32 %v225, %v293
    %v295 = vpop.f32.mrb[0].mxu0
    %296 = vdwg.mxu0
    %v297 = vmax.f32 %v294, 0.0
    %v298 = vld [vmem:[#allocation8] sm:$0xff]
    %v299 = vld [vmem:[#allocation8 + $0x8] sm:$0xff]
    %v300 = vld [vmem:[#allocation8 + $0x10] sm:$0xff]
    %v301 = vld [vmem:[#allocation8 + $0x18] sm:$0xff]
    %v302 = vld [vmem:[#allocation8 + $0x20] sm:$0xff]
    %v303 = vld [vmem:[#allocation8 + $0x28] sm:$0xff]
    %v304 = vld [vmem:[#allocation8 + $0x30] sm:$0xff]
    %v305 = vld [vmem:[#allocation8 + $0x38] sm:$0xff]
    %v306 = vld [vmem:[#allocation8 + $0x40] sm:$0xff]
    %v307 = vld [vmem:[#allocation8 + $0x48] sm:$0xff]
    %v308 = vld [vmem:[#allocation8 + $0x50] sm:$0xff]
    %v309 = vld [vmem:[#allocation8 + $0x58] sm:$0xff]
    %v310 = vld [vmem:[#allocation8 + $0x60] sm:$0xff]
    %v311 = vld [vmem:[#allocation8 + $0x68] sm:$0xff]
    %v312 = vld [vmem:[#allocation8 + $0x70] sm:$0xff]
    %v313 = vld [vmem:[#allocation8 + $0x78] sm:$0xff]
    %v314 = vld [vmem:[%s6] sm:$0x1]
    %v316 = vlaneseq
    %v317 = vshrl.u32 %v316, 7
    %v318 = vsub.s32 0, %v317
    %v319 = vrot.slane %v314, %v318
    %321 = vmatprep.subr.mxu0 0.0
    %322 = vmatpush1.msra.mxu0 %v298
    %323 = vmatprep.subr.mxu0 0.0
    %324 = vmatpush1.msra.mxu0 %v299
    %325 = vmatprep.subr.mxu0 0.0
    %326 = vmatpush1.msra.mxu0 %v300
    %327 = vmatprep.subr.mxu0 0.0
    %328 = vmatpush1.msra.mxu0 %v301
    %329 = vmatprep.subr.mxu0 0.0
    %330 = vmatpush1.msra.mxu0 %v302
    %331 = vmatprep.subr.mxu0 0.0
    %332 = vmatpush1.msra.mxu0 %v303
    %333 = vmatprep.subr.mxu0 0.0
    %334 = vmatpush1.msra.mxu0 %v304
    %335 = vmatprep.subr.mxu0 0.0
    %336 = vmatpush1.msra.mxu0 %v305
    %337 = vmatprep.subr.mxu0 0.0
    %338 = vmatpush1.msra.mxu0 %v306
    %339 = vmatprep.subr.mxu0 0.0
    %340 = vmatpush1.msra.mxu0 %v307
    %341 = vmatprep.subr.mxu0 0.0
    %342 = vmatpush1.msra.mxu0 %v308
    %343 = vmatprep.subr.mxu0 0.0
    %344 = vmatpush1.msra.mxu0 %v309
    %345 = vmatprep.subr.mxu0 0.0
    %346 = vmatpush1.msra.mxu0 %v310
    %347 = vmatprep.subr.mxu0 0.0
    %348 = vmatpush1.msra.mxu0 %v311
    %349 = vmatprep.subr.mxu0 0.0
    %350 = vmatpush1.msra.mxu0 %v312
    %351 = vmatprep.subr.mxu0 0.0
    %352 = vmatpush1.msra.mxu0 %v313
    %353 = vmatprep.subr.mxu0 0.0
    %354 = vmatpush1.msra.mxu0 0.0
    %355 = vmatprep.subr.mxu0 0.0
    %356 = vmatpush1.msra.mxu0 0.0
    %357 = vmatprep.subr.mxu0 0.0
    %358 = vmatpush1.msra.mxu0 0.0
    %359 = vmatprep.subr.mxu0 0.0
    %360 = vmatpush1.msra.mxu0 0.0
    %361 = vmatprep.subr.mxu0 0.0
    %362 = vmatpush1.msra.mxu0 0.0
    %363 = vmatprep.subr.mxu0 0.0
    %364 = vmatpush1.msra.mxu0 0.0
    %365 = vmatprep.subr.mxu0 0.0
    %366 = vmatpush1.msra.mxu0 0.0
    %367 = vmatprep.subr.mxu0 0.0
    %368 = vmatpush1.msra.mxu0 0.0
    %369 = vmatprep.subr.mxu0 0.0
    %370 = vmatpush1.msra.mxu0 0.0
    %371 = vmatprep.subr.mxu0 0.0
    %372 = vmatpush1.msra.mxu0 0.0
    %373 = vmatprep.subr.mxu0 0.0
    %374 = vmatpush1.msra.mxu0 0.0
    %375 = vmatprep.subr.mxu0 0.0
    %376 = vmatpush1.msra.mxu0 0.0
    %377 = vmatprep.subr.mxu0 0.0
    %378 = vmatpush1.msra.mxu0 0.0
    %379 = vmatprep.subr.mxu0 0.0
    %380 = vmatpush1.msra.mxu0 0.0
    %381 = vmatprep.subr.mxu0 0.0
    %382 = vmatpush1.msra.mxu0 0.0
    %383 = vmatprep.subr.mxu0 0.0
    %384 = vmatpush1.msra.mxu0 0.0
    %385 = vmatprep.mubr.f32.mxu0 0.0
    %386 = vmatmul.mubr.f32.gmra.mrb[0].mxu0 %v297
    %v387 = vpop.f32.mrb[0].mxu0
    %v388 = vadd.f32 %v319, %v387
    %v389 = vpop.f32.mrb[0].mxu0
    %390 = vdwg.mxu0
    %v391 = vmax.f32 %v388, 0.0
    %v392 = vld [vmem:[#allocation10] sm:$0xff]
    %v393 = vld [vmem:[#allocation10 + $0x8] sm:$0xff]
    %v394 = vld [vmem:[#allocation10 + $0x10] sm:$0xff]
    %v395 = vld [vmem:[#allocation10 + $0x18] sm:$0xff]
    %v396 = vld [vmem:[#allocation10 + $0x20] sm:$0xff]
    %v397 = vld [vmem:[#allocation10 + $0x28] sm:$0xff]
    %v398 = vld [vmem:[#allocation10 + $0x30] sm:$0xff]
    %v399 = vld [vmem:[#allocation10 + $0x38] sm:$0xff]
    %v400 = vld [vmem:[#allocation10 + $0x40] sm:$0xff]
    %v401 = vld [vmem:[#allocation10 + $0x48] sm:$0xff]
    %v402 = vld [vmem:[#allocation10 + $0x50] sm:$0xff]
    %v403 = vld [vmem:[#allocation10 + $0x58] sm:$0xff]
    %v404 = vld [vmem:[#allocation10 + $0x60] sm:$0xff]
    %v405 = vld [vmem:[#allocation10 + $0x68] sm:$0xff]
    %v406 = vld [vmem:[#allocation10 + $0x70] sm:$0xff]
    %v407 = vld [vmem:[#allocation10 + $0x78] sm:$0xff]
    %v408 = vld [vmem:[%s8] sm:$0x1]
    %v410 = vlaneseq
    %v411 = vshrl.u32 %v410, 7
    %v412 = vsub.s32 0, %v411
    %v413 = vrot.slane %v408, %v412
    %415 = vmatprep.subr.mxu0 0.0
    %416 = vmatpush1.msra.mxu0 %v392
    %417 = vmatprep.subr.mxu0 0.0
    %418 = vmatpush1.msra.mxu0 %v393
    %419 = vmatprep.subr.mxu0 0.0
    %420 = vmatpush1.msra.mxu0 %v394
    %421 = vmatprep.subr.mxu0 0.0
    %422 = vmatpush1.msra.mxu0 %v395
    %423 = vmatprep.subr.mxu0 0.0
    %424 = vmatpush1.msra.mxu0 %v396
    %425 = vmatprep.subr.mxu0 0.0
    %426 = vmatpush1.msra.mxu0 %v397
    %427 = vmatprep.subr.mxu0 0.0
    %428 = vmatpush1.msra.mxu0 %v398
    %429 = vmatprep.subr.mxu0 0.0
    %430 = vmatpush1.msra.mxu0 %v399
    %431 = vmatprep.subr.mxu0 0.0
    %432 = vmatpush1.msra.mxu0 %v400
    %433 = vmatprep.subr.mxu0 0.0
    %434 = vmatpush1.msra.mxu0 %v401
    %435 = vmatprep.subr.mxu0 0.0
    %436 = vmatpush1.msra.mxu0 %v402
    %437 = vmatprep.subr.mxu0 0.0
    %438 = vmatpush1.msra.mxu0 %v403
    %439 = vmatprep.subr.mxu0 0.0
    %440 = vmatpush1.msra.mxu0 %v404
    %441 = vmatprep.subr.mxu0 0.0
    %442 = vmatpush1.msra.mxu0 %v405
    %443 = vmatprep.subr.mxu0 0.0
    %444 = vmatpush1.msra.mxu0 %v406
    %445 = vmatprep.subr.mxu0 0.0
    %446 = vmatpush1.msra.mxu0 %v407
    %447 = vmatprep.subr.mxu0 0.0
    %448 = vmatpush1.msra.mxu0 0.0
    %449 = vmatprep.subr.mxu0 0.0
    %450 = vmatpush1.msra.mxu0 0.0
    %451 = vmatprep.subr.mxu0 0.0
    %452 = vmatpush1.msra.mxu0 0.0
    %453 = vmatprep.subr.mxu0 0.0
    %454 = vmatpush1.msra.mxu0 0.0
    %455 = vmatprep.subr.mxu0 0.0
    %456 = vmatpush1.msra.mxu0 0.0
    %457 = vmatprep.subr.mxu0 0.0
    %458 = vmatpush1.msra.mxu0 0.0
    %459 = vmatprep.subr.mxu0 0.0
    %460 = vmatpush1.msra.mxu0 0.0
    %461 = vmatprep.subr.mxu0 0.0
    %462 = vmatpush1.msra.mxu0 0.0
    %463 = vmatprep.subr.mxu0 0.0
    %464 = vmatpush1.msra.mxu0 0.0
    %465 = vmatprep.subr.mxu0 0.0
    %466 = vmatpush1.msra.mxu0 0.0
    %467 = vmatprep.subr.mxu0 0.0
    %468 = vmatpush1.msra.mxu0 0.0
    %469 = vmatprep.subr.mxu0 0.0
    %470 = vmatpush1.msra.mxu0 0.0
    %471 = vmatprep.subr.mxu0 0.0
    %472 = vmatpush1.msra.mxu0 0.0
    %473 = vmatprep.subr.mxu0 0.0
    %474 = vmatpush1.msra.mxu0 0.0
    %475 = vmatprep.subr.mxu0 0.0
    %476 = vmatpush1.msra.mxu0 0.0
    %477 = vmatprep.subr.mxu0 0.0
    %478 = vmatpush1.msra.mxu0 0.0
    %479 = vmatprep.mubr.f32.mxu0 0.0
    %480 = vmatmul.mubr.f32.gmra.mrb[0].mxu0 %v391
    %v481 = vpop.f32.mrb[0].mxu0
    %v482 = vadd.f32 %v413, %v481
    %v483 = vpop.f32.mrb[0].mxu0
    %484 = vdwg.mxu0
    %v485 = vmax.f32 %v482, 0.0
    %v486 = vld [vmem:[#allocation11] sm:$0xff]
    %v487 = vld [vmem:[#allocation11 + $0x8] sm:$0xff]
    %v488 = vld [vmem:[#allocation11 + $0x10] sm:$0xff]
    %v489 = vld [vmem:[#allocation11 + $0x18] sm:$0xff]
    %v490 = vld [vmem:[#allocation11 + $0x20] sm:$0xff]
    %v491 = vld [vmem:[#allocation11 + $0x28] sm:$0xff]
    %v492 = vld [vmem:[#allocation11 + $0x30] sm:$0xff]
    %v493 = vld [vmem:[#allocation11 + $0x38] sm:$0xff]
    %v494 = vld [vmem:[#allocation11 + $0x40] sm:$0xff]
    %v495 = vld [vmem:[#allocation11 + $0x48] sm:$0xff]
    %v496 = vld [vmem:[#allocation11 + $0x50] sm:$0xff]
    %v497 = vld [vmem:[#allocation11 + $0x58] sm:$0xff]
    %v498 = vld [vmem:[#allocation11 + $0x60] sm:$0xff]
    %v499 = vld [vmem:[#allocation11 + $0x68] sm:$0xff]
    %v500 = vld [vmem:[#allocation11 + $0x70] sm:$0xff]
    %v501 = vld [vmem:[#allocation11 + $0x78] sm:$0xff]
    %v502 = vld [vmem:[%s10] sm:$0x1]
    %v504 = vlaneseq
    %v505 = vshrl.u32 %v504, 7
    %v506 = vsub.s32 0, %v505
    %v507 = vrot.slane %v502, %v506
    %509 = vmatprep.subr.mxu0 0.0
    %510 = vmatpush1.msra.mxu0 %v486
    %511 = vmatprep.subr.mxu0 0.0
    %512 = vmatpush1.msra.mxu0 %v487
    %513 = vmatprep.subr.mxu0 0.0
    %514 = vmatpush1.msra.mxu0 %v488
    %515 = vmatprep.subr.mxu0 0.0
    %516 = vmatpush1.msra.mxu0 %v489
    %517 = vmatprep.subr.mxu0 0.0
    %518 = vmatpush1.msra.mxu0 %v490
    %519 = vmatprep.subr.mxu0 0.0
    %520 = vmatpush1.msra.mxu0 %v491
    %521 = vmatprep.subr.mxu0 0.0
    %522 = vmatpush1.msra.mxu0 %v492
    %523 = vmatprep.subr.mxu0 0.0
    %524 = vmatpush1.msra.mxu0 %v493
    %525 = vmatprep.subr.mxu0 0.0
    %526 = vmatpush1.msra.mxu0 %v494
    %527 = vmatprep.subr.mxu0 0.0
    %528 = vmatpush1.msra.mxu0 %v495
    %529 = vmatprep.subr.mxu0 0.0
    %530 = vmatpush1.msra.mxu0 %v496
    %531 = vmatprep.subr.mxu0 0.0
    %532 = vmatpush1.msra.mxu0 %v497
    %533 = vmatprep.subr.mxu0 0.0
    %534 = vmatpush1.msra.mxu0 %v498
    %535 = vmatprep.subr.mxu0 0.0
    %536 = vmatpush1.msra.mxu0 %v499
    %537 = vmatprep.subr.mxu0 0.0
    %538 = vmatpush1.msra.mxu0 %v500
    %539 = vmatprep.subr.mxu0 0.0
    %540 = vmatpush1.msra.mxu0 %v501
    %541 = vmatprep.subr.mxu0 0.0
    %542 = vmatpush1.msra.mxu0 0.0
    %543 = vmatprep.subr.mxu0 0.0
    %544 = vmatpush1.msra.mxu0 0.0
    %545 = vmatprep.subr.mxu0 0.0
    %546 = vmatpush1.msra.mxu0 0.0
    %547 = vmatprep.subr.mxu0 0.0
    %548 = vmatpush1.msra.mxu0 0.0
    %549 = vmatprep.subr.mxu0 0.0
    %550 = vmatpush1.msra.mxu0 0.0
    %551 = vmatprep.subr.mxu0 0.0
    %552 = vmatpush1.msra.mxu0 0.0
    %553 = vmatprep.subr.mxu0 0.0
    %554 = vmatpush1.msra.mxu0 0.0
    %555 = vmatprep.subr.mxu0 0.0
    %556 = vmatpush1.msra.mxu0 0.0
    %557 = vmatprep.subr.mxu0 0.0
    %558 = vmatpush1.msra.mxu0 0.0
    %559 = vmatprep.subr.mxu0 0.0
    %560 = vmatpush1.msra.mxu0 0.0
    %561 = vmatprep.subr.mxu0 0.0
    %562 = vmatpush1.msra.mxu0 0.0
    %563 = vmatprep.subr.mxu0 0.0
    %564 = vmatpush1.msra.mxu0 0.0
    %565 = vmatprep.subr.mxu0 0.0
    %566 = vmatpush1.msra.mxu0 0.0
    %567 = vmatprep.subr.mxu0 0.0
    %568 = vmatpush1.msra.mxu0 0.0
    %569 = vmatprep.subr.mxu0 0.0
    %570 = vmatpush1.msra.mxu0 0.0
    %571 = vmatprep.subr.mxu0 0.0
    %572 = vmatpush1.msra.mxu0 0.0
    %573 = vmatprep.mubr.f32.mxu0 0.0
    %574 = vmatmul.mubr.f32.gmra.mrb[0].mxu0 %v485
    %v575 = vpop.f32.mrb[0].mxu0
    %v576 = vadd.f32 %v507, %v575
    %v577 = vpop.f32.mrb[0].mxu0
    %578 = vdwg.mxu0
    %579 = vst [vmem:[#allocation13] sm:$0xff] %v576
    // Predicated region
    $region70: #{tpu_custom_call.1} parent=1 // pred_check
      _
    $region71: #{tpu_custom_call.1} parent=1 // pred_check_branch
      %581 = sbr.rel (0) target = $region73
    $region72: #{tpu_custom_call.1} parent=1 // pred_region
      %s583 = ssub.s32 128, 128
      %584 = vsyncadd [#allocation4], %s583
      %s586 = sshll.u32 [#allocation13], 4
      %s587 = int_to_ptr.vmem [resolvable:$true] %s586
      %589 = dma.vmem_to_hbm [thread:$0]  %s587, 128, %s11, [#allocation4]
    $region73: #{tpu_custom_call.1} parent=1 // pred_fallthru
      _
    // Predicated region
    $region74: #{tpu_custom_call.1} parent=1 // pred_check
      _
    $region75: #{tpu_custom_call.1} parent=1 // pred_check_branch
      %591 = sbr.rel (0) target = $region77
    $region76: #{tpu_custom_call.1} parent=1 // pred_region
      %592 = dma.done [#allocation4], 128
    $region77: #{tpu_custom_call.1} parent=1 // pred_fallthru
      _
    %593 = vsyncpa [#allocation3], 1
    %594 = vsyncpa [#allocation6], 1
    %595 = vsyncpa [#allocation9], 1
    %596 = vsyncpa [#allocation12], 1
    %597 = vsyncpa [#allocation4], 1

</llo_original>
